<compile_context>
chip_gen: v7x
topology: tpu7x:2x2x1
jax: 0.10.0
libtpu: 0.0.40
codegen_flags: <defaults>
</compile_context>

<pallas_src>
import numpy as np
import jax
import jax.numpy as jnp
from jax import lax
from jax.experimental import pallas as pl
from jax.experimental.pallas import tpu as pltpu


def build_ccw_kernel(C_l, C_r, H, W, hid, batch_block):
    """Fused CCWBlock on NCHW-flattened (batch_block, C, H*W) blocks."""
    HW = H * W

    def kernel(x_ref, cr_ref, dww_ref, dwb_ref,
               w1_ref, b1_ref, w2_ref, b2_ref, out_ref):
        f32 = jnp.float32

        # ---- constants hoisted out of the per-image loop --------------------
        lane = lax.broadcasted_iota(jnp.int32, (1, HW), 1)
        wpos = lane & (W - 1)                       # w coordinate (W is pow2)
        m_h = {-1: lane >= W, 0: None, 1: lane < HW - W}
        m_w = {-1: wpos >= 1, 0: None, 1: wpos < W - 1}

        dww = dww_ref[...]                                          # (C_r, 9)
        wtap = [jnp.broadcast_to(dww[:, k:k + 1], (C_r, HW)) for k in range(9)]
        dwb_b = jnp.broadcast_to(dwb_ref[...], (C_r, HW))           # (C_r, HW)
        w1 = w1_ref[...]                                            # (C_r, hid)
        b1 = b1_ref[...]                                            # (1, hid)
        w2 = w2_ref[...]                                            # (C_r, hid)
        b2 = b2_ref[...]                                            # (C_r, 1)
        inv_hw = 1.0 / float(HW)

        taps = [(dh, dw) for dh in (-1, 0, 1) for dw in (-1, 0, 1)]

        # batch_block is small (<=8): a static unroll keeps live ranges short
        # while the grid provides the DMA/compute pipelining across steps.
        for b in range(batch_block):
            x = x_ref[b]                            # (C_l + C_r, HW)
            xl = x[:C_l, :]                         # left branch = Identity
            xm = x[C_l:, :] * cr_ref[b]             # cr-gated right input

            # 3x3 depthwise conv, stride 1, SAME: lane rolls + border masks.
            acc = jnp.zeros((C_r, HW), f32)
            for k, (dh, dw) in enumerate(taps):
                d = dh * W + dw
                v = xm if d == 0 else pltpu.roll(xm, (-d) % HW, axis=1)
                mh, mw = m_h[dh], m_w[dw]
                mask = mh if mw is None else (mw if mh is None else mh & mw)
                if mask is not None:
                    v = jnp.where(mask, v, 0.0)
                acc = acc + v * wtap[k]
            y = jnp.maximum(acc + dwb_b, 0.0)       # BN scale folded into taps

            # SpatialWeightModule: pool -> fc1 -> relu -> fc2 -> sigmoid,
            # vectorized over the hidden dim; no MXU, no layout transposes.
            pooled = jnp.sum(y, axis=1, keepdims=True) * inv_hw     # (C_r, 1)
            s1 = jnp.sum(pooled * w1, axis=0, keepdims=True)        # (1, hid)
            h1 = jnp.maximum(s1 + b1, 0.0)                          # (1, hid)
            z = b2                                                  # (C_r, 1)
            for j in range(hid):
                z = z + h1[:, j:j + 1] * w2[:, j:j + 1]
            sw = 1.0 / (1.0 + jnp.exp(-z))          # exact sigmoid (gate)
            yr = y * sw                                             # (C_r, HW)

            # Fused concat + channel_shuffle(groups=2): out[2i] = left[i],
            # out[2i+1] = right[i]. Row-interleaved writes make pallas_call's
            # output the final shuffled NCHW tensor.
            for i in range(C_l):
                out_ref[b, 2 * i:2 * i + 1, :] = \
                    xl[i:i + 1, :].astype(out_ref.dtype)
                out_ref[b, 2 * i + 1:2 * i + 2, :] = \
                    yr[i:i + 1, :].astype(out_ref.dtype)

    return kernel


def ccw_block_forward(feats_nchw, cr_weight_nchw, params, in_ch_l,
                      batch_block=None):
    """CCWBlock forward (stride=1, in_ch_l == out_ch_l -> left branch Identity)."""
    N, Cin, H, W = feats_nchw.shape
    C_l = in_ch_l
    C_r = Cin - in_ch_l
    Cout = Cin
    HW = H * W
    assert C_l == C_r, "channel_shuffle(groups=2) + Identity left needs equal splits"
    assert C_r % 8 == 0 and Cin % 8 == 0 and HW % 128 == 0, "tile alignment"
    assert (W & (W - 1)) == 0, "border masks assume power-of-two W"  # TODO(synk): general W via lane % W

    # Nearest upsample of the coarse cr gate (tiny tensor, kept in the wrapper).
    # TODO(synk): replicate the coarse gate inside the kernel to drop this
    #             sh*sw-times-larger cr stream entirely.
    Hc, Wc = cr_weight_nchw.shape[2], cr_weight_nchw.shape[3]
    if H % Hc == 0 and W % Wc == 0:
        sh, sw = H // Hc, W // Wc
        cr_up = jnp.broadcast_to(
            cr_weight_nchw[:, :, :, None, :, None],
            (N, C_r, Hc, sh, Wc, sw)).reshape(N, C_r, H, W)
    else:  # exact PyTorch 'nearest' indexing for non-integral ratios
        ih = (jnp.arange(H) * Hc) // H
        iw = (jnp.arange(W) * Wc) // W
        cr_up = cr_weight_nchw[:, :, ih][:, :, :, iw]

    # NCHW-native lane-dense layout: fold (H, W) into the lane dim (free).
    x_flat = feats_nchw.reshape(N, Cin, HW)
    cr_flat = cr_up.reshape(N, C_r, HW)

    # Fold BN scales into the weights (tiny, one-time).
    hid = params['fc1_w'].shape[1]
    dww = (params['dw_w'] * params['dw_scale'][0]).reshape(9, C_r).T   # (C_r, 9)
    dwb = params['dw_bias'].reshape(C_r, 1)                            # (C_r, 1)
    w1f = params['fc1_w'] * params['fc1_scale']                        # (C_r, hid)
    b1f = params['fc1_bias']                                           # (1, hid)
    w2f = (params['fc2_w'] * params['fc2_scale']).T                    # (C_r, hid)
    b2f = params['fc2_bias'].reshape(C_r, 1)                           # (C_r, 1)

    # Batch blocking per generation: one big step per TensorCore on dual-TC
    # v7x; moderate double-buffered blocks on single-TC v5e/v6e.
    if batch_block is None:
        try:
            kind = jax.devices()[0].device_kind.lower()
        except Exception:
            kind = ""
        batch_block = max(1, (N + 1) // 2) if "v7" in kind else min(N, 8)
    # Conservative scoped-VMEM budget (<= 8 MiB double-buffered) that fits the
    # smallest default (v5e 16 MiB) with headroom for in-kernel temporaries.
    per_image = (Cin + C_r + Cout) * HW * 4
    while batch_block > 1 and (N % batch_block != 0 or
                               2 * batch_block * per_image > (8 << 20)):
        batch_block -= 1
    grid = (N // batch_block,)

    kernel = build_ccw_kernel(C_l, C_r, H, W, hid, batch_block)
    x_spec = pl.BlockSpec((batch_block, Cin, HW), lambda n: (n, 0, 0))
    cr_spec = pl.BlockSpec((batch_block, C_r, HW), lambda n: (n, 0, 0))
    out_spec = pl.BlockSpec((batch_block, Cout, HW), lambda n: (n, 0, 0))

    def wspec(shape):
        return pl.BlockSpec(shape, lambda n: (0, 0))

    out_flat = pl.pallas_call(
        kernel,
        out_shape=jax.ShapeDtypeStruct((N, Cout, HW), jnp.float32),
        grid=grid,
        in_specs=[x_spec, cr_spec,
                  wspec((C_r, 9)), wspec((C_r, 1)),
                  wspec((C_r, hid)), wspec((1, hid)),
                  wspec((C_r, hid)), wspec((C_r, 1))],
        out_specs=out_spec,
        compiler_params=pltpu.CompilerParams(dimension_semantics=("parallel",)),
    )(x_flat, cr_flat, dww, dwb, w1f, b1f, w2f, b2f)

    # Output is already concat + channel_shuffled; only a free reshape remains.
    return out_flat.reshape(N, Cout, H, W)


def make_params(key, c_r, ch_reduction=8, eps=1e-5):
    """Deterministic synthetic weights; BN folded into (scale, bias)."""
    hid = max(c_r // ch_reduction, 1)
    ks = jax.random.split(key, 15)

    def fold_bn(kg, kb, km, kv, c):
        gamma = jax.random.uniform(kg, (c,), minval=0.5, maxval=1.5)
        beta = 0.1 * jax.random.normal(kb, (c,))
        mean = 0.1 * jax.random.normal(km, (c,))
        var = jax.random.uniform(kv, (c,), minval=0.5, maxval=1.5)
        scale = gamma / jnp.sqrt(var + eps)
        bias = beta - mean * scale
        return (scale.reshape(1, c).astype(jnp.float32),
                bias.reshape(1, c).astype(jnp.float32))

    dw_w = 0.2 * jax.random.normal(ks[0], (3, 3, c_r), jnp.float32)
    dw_scale, dw_bias = fold_bn(ks[1], ks[2], ks[3], ks[4], c_r)
    fc1_w = 0.2 * jax.random.normal(ks[5], (c_r, hid), jnp.float32)
    fc1_scale, fc1_bias = fold_bn(ks[6], ks[7], ks[8], ks[9], hid)
    fc2_w = 0.2 * jax.random.normal(ks[10], (hid, c_r), jnp.float32)
    fc2_scale, fc2_bias = fold_bn(ks[11], ks[12], ks[13], ks[14], c_r)
    return dict(dw_w=dw_w, dw_scale=dw_scale, dw_bias=dw_bias,
                fc1_w=fc1_w, fc1_scale=fc1_scale, fc1_bias=fc1_bias,
                fc2_w=fc2_w, fc2_scale=fc2_scale, fc2_bias=fc2_bias)


def reference_forward(feats_nchw, cr_weight_nchw, params, in_ch_l):
    """Pure-JAX reference (same math as the PyTorch module, eval-mode BN)."""
    N, Cin, H, W = feats_nchw.shape
    x = jnp.transpose(feats_nchw, (0, 2, 3, 1))
    feats_l = x[..., :in_ch_l]
    feats_r = x[..., in_ch_l:]
    C_r = feats_r.shape[-1]

    cr = jnp.transpose(cr_weight_nchw, (0, 2, 3, 1))
    Hc, Wc = cr.shape[1], cr.shape[2]
    ih = (jnp.arange(H) * Hc) // H
    iw = (jnp.arange(W) * Wc) // W
    cr_up = cr[:, ih][:, :, iw]

    xm = feats_r * cr_up
    y = lax.conv_general_dilated(
        xm, params['dw_w'].reshape(3, 3, 1, C_r), (1, 1), 'SAME',
        dimension_numbers=('NHWC', 'HWIO', 'NHWC'),
        feature_group_count=C_r, precision=lax.Precision.HIGHEST)
    y = jnp.maximum(y * params['dw_scale'][0] + params['dw_bias'][0], 0.0)

    pooled = jnp.mean(y, axis=(1, 2))                            # (N, C_r)
    h1 = jnp.dot(pooled, params['fc1_w'], precision=lax.Precision.HIGHEST)
    h1 = jnp.maximum(h1 * params['fc1_scale'] + params['fc1_bias'], 0.0)
    h2 = jnp.dot(h1, params['fc2_w'], precision=lax.Precision.HIGHEST)
    sw = jax.nn.sigmoid(h2 * params['fc2_scale'] + params['fc2_bias'])
    y = y * sw[:, None, None, :]

    feats_cat = jnp.concatenate([feats_l, y], axis=-1)
    Cout = feats_cat.shape[-1]
    fs = feats_cat.reshape(N, H, W, 2, Cout // 2)
    fs = jnp.swapaxes(fs, -1, -2).reshape(N, H, W, Cout)
    return jnp.transpose(fs, (0, 3, 1, 2))


if __name__ == "__main__":
    key = jax.random.PRNGKey(0)
    k_feats, k_cr, k_par = jax.random.split(key, 3)

    # CCWBlock(in_channels=32, out_channels=32, stride=1, act_type='relu')
    N, Cin, H, W = 2, 32, 16, 16
    in_ch_l = Cin // 2
    C_r = Cin - in_ch_l                      # right-branch channels (=16)

    feats = jax.random.normal(k_feats, (N, Cin, H, W), jnp.float32)
    # cr_weight arrives at a coarser resolution and is nearest-upsampled
    cr_weight = jax.random.uniform(k_cr, (N, C_r, H // 2, W // 2),
                                   jnp.float32, minval=0.0, maxval=1.0)
    params = make_params(k_par, C_r)

    out = ccw_block_forward(feats, cr_weight, params, in_ch_l)
    jax.block_until_ready(out)
    assert out.shape == (N, Cin, H, W)

    ref = reference_forward(feats, cr_weight, params, in_ch_l)
    np.testing.assert_allclose(np.asarray(out), np.asarray(ref),
                               rtol=2e-3, atol=2e-3)
    print("KERNEL_OK")
</pallas_src>

<mosaic_0001>
module attributes {stable_mosaic.version = 11 : i64} {
  func.func @kernel(%arg0: i32, %arg1: memref<2x32x256xf32, #tpu.memory_space<vmem>>, %arg2: memref<2x16x256xf32, #tpu.memory_space<vmem>>, %arg3: memref<16x9xf32, #tpu.memory_space<vmem>>, %arg4: memref<16x1xf32, #tpu.memory_space<vmem>>, %arg5: memref<16x2xf32, #tpu.memory_space<vmem>>, %arg6: memref<1x2xf32, #tpu.memory_space<vmem>>, %arg7: memref<16x2xf32, #tpu.memory_space<vmem>>, %arg8: memref<16x1xf32, #tpu.memory_space<vmem>>, %arg9: memref<2x32x256xf32, #tpu.memory_space<vmem>>) attributes {dimension_semantics = [#tpu.dimension_semantics<parallel>], iteration_bounds = array<i64: 1>, scalar_prefetch = 0 : i64, scratch_operands = 0 : i64, tpu.core_type = #tpu.core_type<tc>, window_params = [{transform_indices = @transform_0, window_bounds = array<i64: 2, 32, 256>}, {transform_indices = @transform_1, window_bounds = array<i64: 2, 16, 256>}, {pipeline_mode = #tpu.pipeline_mode<synchronous>, transform_indices = @transform_2, window_bounds = array<i64: 16, 9>}, {pipeline_mode = #tpu.pipeline_mode<synchronous>, transform_indices = @transform_3, window_bounds = array<i64: 16, 1>}, {pipeline_mode = #tpu.pipeline_mode<synchronous>, transform_indices = @transform_4, window_bounds = array<i64: 16, 2>}, {pipeline_mode = #tpu.pipeline_mode<synchronous>, transform_indices = @transform_5, window_bounds = array<i64: 1, 2>}, {pipeline_mode = #tpu.pipeline_mode<synchronous>, transform_indices = @transform_6, window_bounds = array<i64: 16, 2>}, {pipeline_mode = #tpu.pipeline_mode<synchronous>, transform_indices = @transform_7, window_bounds = array<i64: 16, 1>}, {transform_indices = @transform_8, window_bounds = array<i64: 2, 32, 256>}]} {
    %0 = tpu.iota {dimensions = array<i32: 1>} : vector<1x256xi32>
    %c15_i32 = arith.constant 15 : i32
    %1 = vector.broadcast %c15_i32 : i32 to vector<1x256xi32>
    %2 = arith.andi %0, %1 : vector<1x256xi32>
    %c16_i32 = arith.constant 16 : i32
    %3 = vector.broadcast %c16_i32 : i32 to vector<1x256xi32>
    %4 = arith.cmpi sge, %0, %3 : vector<1x256xi32>
    %c240_i32 = arith.constant 240 : i32
    %5 = vector.broadcast %c240_i32 : i32 to vector<1x256xi32>
    %6 = arith.cmpi slt, %0, %5 : vector<1x256xi32>
    %c1_i32 = arith.constant 1 : i32
    %7 = vector.broadcast %c1_i32 : i32 to vector<1x256xi32>
    %8 = arith.cmpi sge, %2, %7 : vector<1x256xi32>
    %c15_i32_0 = arith.constant 15 : i32
    %9 = vector.broadcast %c15_i32_0 : i32 to vector<1x256xi32>
    %10 = arith.cmpi slt, %2, %9 : vector<1x256xi32>
    %c0 = arith.constant 0 : index
    %c0_1 = arith.constant 0 : index
    %11 = vector.load %arg3[%c0, %c0_1] : memref<16x9xf32, #tpu.memory_space<vmem>>, vector<16x9xf32>
    %12 = vector.extract_strided_slice %11 {offsets = [0, 0], sizes = [16, 1], strides = [1, 1]} : vector<16x9xf32> to vector<16x1xf32>
    %13 = vector.shape_cast %12 : vector<16x1xf32> to vector<16x1xf32>
    %14 = vector.broadcast %13 : vector<16x1xf32> to vector<16x256xf32>
    %15 = vector.extract_strided_slice %11 {offsets = [0, 1], sizes = [16, 1], strides = [1, 1]} : vector<16x9xf32> to vector<16x1xf32>
    %16 = vector.shape_cast %15 : vector<16x1xf32> to vector<16x1xf32>
    %17 = vector.broadcast %16 : vector<16x1xf32> to vector<16x256xf32>
    %18 = vector.extract_strided_slice %11 {offsets = [0, 2], sizes = [16, 1], strides = [1, 1]} : vector<16x9xf32> to vector<16x1xf32>
    %19 = vector.shape_cast %18 : vector<16x1xf32> to vector<16x1xf32>
    %20 = vector.broadcast %19 : vector<16x1xf32> to vector<16x256xf32>
    %21 = vector.extract_strided_slice %11 {offsets = [0, 3], sizes = [16, 1], strides = [1, 1]} : vector<16x9xf32> to vector<16x1xf32>
    %22 = vector.shape_cast %21 : vector<16x1xf32> to vector<16x1xf32>
    %23 = vector.broadcast %22 : vector<16x1xf32> to vector<16x256xf32>
    %24 = vector.extract_strided_slice %11 {offsets = [0, 4], sizes = [16, 1], strides = [1, 1]} : vector<16x9xf32> to vector<16x1xf32>
    %25 = vector.shape_cast %24 : vector<16x1xf32> to vector<16x1xf32>
    %26 = vector.broadcast %25 : vector<16x1xf32> to vector<16x256xf32>
    %27 = vector.extract_strided_slice %11 {offsets = [0, 5], sizes = [16, 1], strides = [1, 1]} : vector<16x9xf32> to vector<16x1xf32>
    %28 = vector.shape_cast %27 : vector<16x1xf32> to vector<16x1xf32>
    %29 = vector.broadcast %28 : vector<16x1xf32> to vector<16x256xf32>
    %30 = vector.extract_strided_slice %11 {offsets = [0, 6], sizes = [16, 1], strides = [1, 1]} : vector<16x9xf32> to vector<16x1xf32>
    %31 = vector.shape_cast %30 : vector<16x1xf32> to vector<16x1xf32>
    %32 = vector.broadcast %31 : vector<16x1xf32> to vector<16x256xf32>
    %33 = vector.extract_strided_slice %11 {offsets = [0, 7], sizes = [16, 1], strides = [1, 1]} : vector<16x9xf32> to vector<16x1xf32>
    %34 = vector.shape_cast %33 : vector<16x1xf32> to vector<16x1xf32>
    %35 = vector.broadcast %34 : vector<16x1xf32> to vector<16x256xf32>
    %36 = vector.extract_strided_slice %11 {offsets = [0, 8], sizes = [16, 1], strides = [1, 1]} : vector<16x9xf32> to vector<16x1xf32>
    %37 = vector.shape_cast %36 : vector<16x1xf32> to vector<16x1xf32>
    %38 = vector.broadcast %37 : vector<16x1xf32> to vector<16x256xf32>
    %c0_2 = arith.constant 0 : index
    %c0_3 = arith.constant 0 : index
    %39 = vector.load %arg4[%c0_2, %c0_3] : memref<16x1xf32, #tpu.memory_space<vmem>>, vector<16x1xf32>
    %40 = vector.shape_cast %39 : vector<16x1xf32> to vector<16x1xf32>
    %41 = vector.broadcast %40 : vector<16x1xf32> to vector<16x256xf32>
    %c0_4 = arith.constant 0 : index
    %c0_5 = arith.constant 0 : index
    %42 = vector.load %arg5[%c0_4, %c0_5] : memref<16x2xf32, #tpu.memory_space<vmem>>, vector<16x2xf32>
    %c0_6 = arith.constant 0 : index
    %c0_7 = arith.constant 0 : index
    %43 = vector.load %arg6[%c0_6, %c0_7] : memref<1x2xf32, #tpu.memory_space<vmem>>, vector<1x2xf32>
    %c0_8 = arith.constant 0 : index
    %c0_9 = arith.constant 0 : index
    %44 = vector.load %arg7[%c0_8, %c0_9] : memref<16x2xf32, #tpu.memory_space<vmem>>, vector<16x2xf32>
    %c0_10 = arith.constant 0 : index
    %c0_11 = arith.constant 0 : index
    %45 = vector.load %arg8[%c0_10, %c0_11] : memref<16x1xf32, #tpu.memory_space<vmem>>, vector<16x1xf32>
    %c0_12 = arith.constant 0 : index
    %c0_13 = arith.constant 0 : index
    %c0_14 = arith.constant 0 : index
    %46 = vector.load %arg1[%c0_12, %c0_13, %c0_14] : memref<2x32x256xf32, #tpu.memory_space<vmem>>, vector<1x32x256xf32>
    %47 = vector.shape_cast %46 : vector<1x32x256xf32> to vector<32x256xf32>
    %48 = vector.extract_strided_slice %47 {offsets = [0, 0], sizes = [16, 256], strides = [1, 1]} : vector<32x256xf32> to vector<16x256xf32>
    %49 = vector.extract_strided_slice %47 {offsets = [16, 0], sizes = [16, 256], strides = [1, 1]} : vector<32x256xf32> to vector<16x256xf32>
    %c0_15 = arith.constant 0 : index
    %c0_16 = arith.constant 0 : index
    %c0_17 = arith.constant 0 : index
    %50 = vector.load %arg2[%c0_15, %c0_16, %c0_17] : memref<2x16x256xf32, #tpu.memory_space<vmem>>, vector<1x16x256xf32>
    %51 = vector.shape_cast %50 : vector<1x16x256xf32> to vector<16x256xf32>
    %52 = arith.mulf %49, %51 : vector<16x256xf32>
    %cst = arith.constant 0.000000e+00 : f32
    %53 = vector.broadcast %cst : f32 to vector<16x256xf32>
    %c17_i32 = arith.constant 17 : i32
    %54 = tpu.dynamic_rotate %52 by %c17_i32 dim 1 : vector<16x256xf32>, i32 -> vector<16x256xf32>
    %55 = arith.andi %4, %8 : vector<1x256xi1>
    %cst_18 = arith.constant 0.000000e+00 : f32
    %56 = vector.shape_cast %55 : vector<1x256xi1> to vector<1x256xi1>
    %57 = vector.broadcast %56 : vector<1x256xi1> to vector<16x256xi1>
    %58 = vector.broadcast %cst_18 : f32 to vector<16x256xf32>
    %59 = arith.select %57, %54, %58 : vector<16x256xi1>, vector<16x256xf32>
    %60 = arith.mulf %59, %14 : vector<16x256xf32>
    %61 = arith.addf %53, %60 : vector<16x256xf32>
    %c16_i32_19 = arith.constant 16 : i32
    %62 = tpu.dynamic_rotate %52 by %c16_i32_19 dim 1 : vector<16x256xf32>, i32 -> vector<16x256xf32>
    %cst_20 = arith.constant 0.000000e+00 : f32
    %63 = vector.shape_cast %4 : vector<1x256xi1> to vector<1x256xi1>
    %64 = vector.broadcast %63 : vector<1x256xi1> to vector<16x256xi1>
    %65 = vector.broadcast %cst_20 : f32 to vector<16x256xf32>
    %66 = arith.select %64, %62, %65 : vector<16x256xi1>, vector<16x256xf32>
    %67 = arith.mulf %66, %17 : vector<16x256xf32>
    %68 = arith.addf %61, %67 : vector<16x256xf32>
    %c15_i32_21 = arith.constant 15 : i32
    %69 = tpu.dynamic_rotate %52 by %c15_i32_21 dim 1 : vector<16x256xf32>, i32 -> vector<16x256xf32>
    %70 = arith.andi %4, %10 : vector<1x256xi1>
    %cst_22 = arith.constant 0.000000e+00 : f32
    %71 = vector.shape_cast %70 : vector<1x256xi1> to vector<1x256xi1>
    %72 = vector.broadcast %71 : vector<1x256xi1> to vector<16x256xi1>
    %73 = vector.broadcast %cst_22 : f32 to vector<16x256xf32>
    %74 = arith.select %72, %69, %73 : vector<16x256xi1>, vector<16x256xf32>
    %75 = arith.mulf %74, %20 : vector<16x256xf32>
    %76 = arith.addf %68, %75 : vector<16x256xf32>
    %c1_i32_23 = arith.constant 1 : i32
    %77 = tpu.dynamic_rotate %52 by %c1_i32_23 dim 1 : vector<16x256xf32>, i32 -> vector<16x256xf32>
    %cst_24 = arith.constant 0.000000e+00 : f32
    %78 = vector.shape_cast %8 : vector<1x256xi1> to vector<1x256xi1>
    %79 = vector.broadcast %78 : vector<1x256xi1> to vector<16x256xi1>
    %80 = vector.broadcast %cst_24 : f32 to vector<16x256xf32>
    %81 = arith.select %79, %77, %80 : vector<16x256xi1>, vector<16x256xf32>
    %82 = arith.mulf %81, %23 : vector<16x256xf32>
    %83 = arith.addf %76, %82 : vector<16x256xf32>
    %84 = arith.mulf %52, %26 : vector<16x256xf32>
    %85 = arith.addf %83, %84 : vector<16x256xf32>
    %c255_i32 = arith.constant 255 : i32
    %86 = tpu.dynamic_rotate %52 by %c255_i32 dim 1 : vector<16x256xf32>, i32 -> vector<16x256xf32>
    %cst_25 = arith.constant 0.000000e+00 : f32
    %87 = vector.shape_cast %10 : vector<1x256xi1> to vector<1x256xi1>
    %88 = vector.broadcast %87 : vector<1x256xi1> to vector<16x256xi1>
    %89 = vector.broadcast %cst_25 : f32 to vector<16x256xf32>
    %90 = arith.select %88, %86, %89 : vector<16x256xi1>, vector<16x256xf32>
    %91 = arith.mulf %90, %29 : vector<16x256xf32>
    %92 = arith.addf %85, %91 : vector<16x256xf32>
    %c241_i32 = arith.constant 241 : i32
    %93 = tpu.dynamic_rotate %52 by %c241_i32 dim 1 : vector<16x256xf32>, i32 -> vector<16x256xf32>
    %94 = arith.andi %6, %8 : vector<1x256xi1>
    %cst_26 = arith.constant 0.000000e+00 : f32
    %95 = vector.shape_cast %94 : vector<1x256xi1> to vector<1x256xi1>
    %96 = vector.broadcast %95 : vector<1x256xi1> to vector<16x256xi1>
    %97 = vector.broadcast %cst_26 : f32 to vector<16x256xf32>
    %98 = arith.select %96, %93, %97 : vector<16x256xi1>, vector<16x256xf32>
    %99 = arith.mulf %98, %32 : vector<16x256xf32>
    %100 = arith.addf %92, %99 : vector<16x256xf32>
    %c240_i32_27 = arith.constant 240 : i32
    %101 = tpu.dynamic_rotate %52 by %c240_i32_27 dim 1 : vector<16x256xf32>, i32 -> vector<16x256xf32>
    %cst_28 = arith.constant 0.000000e+00 : f32
    %102 = vector.shape_cast %6 : vector<1x256xi1> to vector<1x256xi1>
    %103 = vector.broadcast %102 : vector<1x256xi1> to vector<16x256xi1>
    %104 = vector.broadcast %cst_28 : f32 to vector<16x256xf32>
    %105 = arith.select %103, %101, %104 : vector<16x256xi1>, vector<16x256xf32>
    %106 = arith.mulf %105, %35 : vector<16x256xf32>
    %107 = arith.addf %100, %106 : vector<16x256xf32>
    %c239_i32 = arith.constant 239 : i32
    %108 = tpu.dynamic_rotate %52 by %c239_i32 dim 1 : vector<16x256xf32>, i32 -> vector<16x256xf32>
    %109 = arith.andi %6, %10 : vector<1x256xi1>
    %cst_29 = arith.constant 0.000000e+00 : f32
    %110 = vector.shape_cast %109 : vector<1x256xi1> to vector<1x256xi1>
    %111 = vector.broadcast %110 : vector<1x256xi1> to vector<16x256xi1>
    %112 = vector.broadcast %cst_29 : f32 to vector<16x256xf32>
    %113 = arith.select %111, %108, %112 : vector<16x256xi1>, vector<16x256xf32>
    %114 = arith.mulf %113, %38 : vector<16x256xf32>
    %115 = arith.addf %107, %114 : vector<16x256xf32>
    %116 = arith.addf %115, %41 : vector<16x256xf32>
    %cst_30 = arith.constant 0.000000e+00 : f32
    %117 = vector.broadcast %cst_30 : f32 to vector<16x256xf32>
    %118 = arith.maximumf %116, %117 : vector<16x256xf32>
    %cst_31 = arith.constant dense<0.000000e+00> : vector<16xf32>
    %119 = vector.multi_reduction <add>, %118, %cst_31 [1] : vector<16x256xf32> to vector<16xf32>
    %120 = vector.shape_cast %119 : vector<16xf32> to vector<16x1xf32>
    %cst_32 = arith.constant 3.906250e-03 : f32
    %121 = vector.broadcast %cst_32 : f32 to vector<16x1xf32>
    %122 = arith.mulf %120, %121 : vector<16x1xf32>
    %123 = vector.broadcast %122 : vector<16x1xf32> to vector<16x2xf32>
    %124 = arith.mulf %123, %42 : vector<16x2xf32>
    %cst_33 = arith.constant dense<0.000000e+00> : vector<2xf32>
    %125 = vector.multi_reduction <add>, %124, %cst_33 [0] : vector<16x2xf32> to vector<2xf32>
    %126 = vector.shape_cast %125 : vector<2xf32> to vector<1x2xf32>
    %127 = arith.addf %126, %43 : vector<1x2xf32>
    %cst_34 = arith.constant 0.000000e+00 : f32
    %128 = vector.broadcast %cst_34 : f32 to vector<1x2xf32>
    %129 = arith.maximumf %127, %128 : vector<1x2xf32>
    %130 = vector.extract_strided_slice %129 {offsets = [0, 0], sizes = [1, 1], strides = [1, 1]} : vector<1x2xf32> to vector<1x1xf32>
    %131 = vector.extract_strided_slice %44 {offsets = [0, 0], sizes = [16, 1], strides = [1, 1]} : vector<16x2xf32> to vector<16x1xf32>
    %132 = vector.broadcast %130 : vector<1x1xf32> to vector<16x1xf32>
    %133 = arith.mulf %132, %131 : vector<16x1xf32>
    %134 = arith.addf %45, %133 : vector<16x1xf32>
    %135 = vector.extract_strided_slice %129 {offsets = [0, 1], sizes = [1, 1], strides = [1, 1]} : vector<1x2xf32> to vector<1x1xf32>
    %136 = vector.extract_strided_slice %44 {offsets = [0, 1], sizes = [16, 1], strides = [1, 1]} : vector<16x2xf32> to vector<16x1xf32>
    %137 = vector.broadcast %135 : vector<1x1xf32> to vector<16x1xf32>
    %138 = arith.mulf %137, %136 : vector<16x1xf32>
    %139 = arith.addf %134, %138 : vector<16x1xf32>
    %cst_35 = arith.constant 0.000000e+00 : f32
    %140 = vector.broadcast %cst_35 : f32 to vector<16x1xf32>
    %141 = arith.subf %140, %139 : vector<16x1xf32>
    %142 = math.exp %141 : vector<16x1xf32>
    %cst_36 = arith.constant 1.000000e+00 : f32
    %143 = vector.broadcast %cst_36 : f32 to vector<16x1xf32>
    %144 = arith.addf %143, %142 : vector<16x1xf32>
    %cst_37 = arith.constant 1.000000e+00 : f32
    %145 = vector.broadcast %cst_37 : f32 to vector<16x1xf32>
    %146 = arith.divf %145, %144 : vector<16x1xf32>
    %147 = vector.broadcast %146 : vector<16x1xf32> to vector<16x256xf32>
    %148 = arith.mulf %118, %147 : vector<16x256xf32>
    %149 = vector.extract_strided_slice %48 {offsets = [0, 0], sizes = [1, 256], strides = [1, 1]} : vector<16x256xf32> to vector<1x256xf32>
    %c0_38 = arith.constant 0 : index
    %c0_39 = arith.constant 0 : index
    %c0_40 = arith.constant 0 : index
    %150 = vector.load %arg9[%c0_38, %c0_39, %c0_40] : memref<2x32x256xf32, #tpu.memory_space<vmem>>, vector<1x1x256xf32>
    %151 = vector.shape_cast %150 : vector<1x1x256xf32> to vector<1x256xf32>
    %152 = vector.shape_cast %149 : vector<1x256xf32> to vector<1x1x256xf32>
    tpu.vector_store %arg9[%c0_38, %c0_39, %c0_40], %152 {strides = array<i32>} : memref<2x32x256xf32, #tpu.memory_space<vmem>>, vector<1x1x256xf32>,
    %153 = vector.extract_strided_slice %148 {offsets = [0, 0], sizes = [1, 256], strides = [1, 1]} : vector<16x256xf32> to vector<1x256xf32>
    %c0_41 = arith.constant 0 : index
    %c1 = arith.constant 1 : index
    %c0_42 = arith.constant 0 : index
    %154 = vector.load %arg9[%c0_41, %c1, %c0_42] : memref<2x32x256xf32, #tpu.memory_space<vmem>>, vector<1x1x256xf32>
    %155 = vector.shape_cast %154 : vector<1x1x256xf32> to vector<1x256xf32>
    %156 = vector.shape_cast %153 : vector<1x256xf32> to vector<1x1x256xf32>
    tpu.vector_store %arg9[%c0_41, %c1, %c0_42], %156 {strides = array<i32>} : memref<2x32x256xf32, #tpu.memory_space<vmem>>, vector<1x1x256xf32>,
    %157 = vector.extract_strided_slice %48 {offsets = [1, 0], sizes = [1, 256], strides = [1, 1]} : vector<16x256xf32> to vector<1x256xf32>
    %c0_43 = arith.constant 0 : index
    %c2 = arith.constant 2 : index
    %c0_44 = arith.constant 0 : index
    %158 = vector.load %arg9[%c0_43, %c2, %c0_44] : memref<2x32x256xf32, #tpu.memory_space<vmem>>, vector<1x1x256xf32>
    %159 = vector.shape_cast %158 : vector<1x1x256xf32> to vector<1x256xf32>
    %160 = vector.shape_cast %157 : vector<1x256xf32> to vector<1x1x256xf32>
    tpu.vector_store %arg9[%c0_43, %c2, %c0_44], %160 {strides = array<i32>} : memref<2x32x256xf32, #tpu.memory_space<vmem>>, vector<1x1x256xf32>,
    %161 = vector.extract_strided_slice %148 {offsets = [1, 0], sizes = [1, 256], strides = [1, 1]} : vector<16x256xf32> to vector<1x256xf32>
    %c0_45 = arith.constant 0 : index
    %c3 = arith.constant 3 : index
    %c0_46 = arith.constant 0 : index
    %162 = vector.load %arg9[%c0_45, %c3, %c0_46] : memref<2x32x256xf32, #tpu.memory_space<vmem>>, vector<1x1x256xf32>
    %163 = vector.shape_cast %162 : vector<1x1x256xf32> to vector<1x256xf32>
    %164 = vector.shape_cast %161 : vector<1x256xf32> to vector<1x1x256xf32>
    tpu.vector_store %arg9[%c0_45, %c3, %c0_46], %164 {strides = array<i32>} : memref<2x32x256xf32, #tpu.memory_space<vmem>>, vector<1x1x256xf32>,
    %165 = vector.extract_strided_slice %48 {offsets = [2, 0], sizes = [1, 256], strides = [1, 1]} : vector<16x256xf32> to vector<1x256xf32>
    %c0_47 = arith.constant 0 : index
    %c4 = arith.constant 4 : index
    %c0_48 = arith.constant 0 : index
    %166 = vector.load %arg9[%c0_47, %c4, %c0_48] : memref<2x32x256xf32, #tpu.memory_space<vmem>>, vector<1x1x256xf32>
    %167 = vector.shape_cast %166 : vector<1x1x256xf32> to vector<1x256xf32>
    %168 = vector.shape_cast %165 : vector<1x256xf32> to vector<1x1x256xf32>
    tpu.vector_store %arg9[%c0_47, %c4, %c0_48], %168 {strides = array<i32>} : memref<2x32x256xf32, #tpu.memory_space<vmem>>, vector<1x1x256xf32>,
    %169 = vector.extract_strided_slice %148 {offsets = [2, 0], sizes = [1, 256], strides = [1, 1]} : vector<16x256xf32> to vector<1x256xf32>
    %c0_49 = arith.constant 0 : index
    %c5 = arith.constant 5 : index
    %c0_50 = arith.constant 0 : index
    %170 = vector.load %arg9[%c0_49, %c5, %c0_50] : memref<2x32x256xf32, #tpu.memory_space<vmem>>, vector<1x1x256xf32>
    %171 = vector.shape_cast %170 : vector<1x1x256xf32> to vector<1x256xf32>
    %172 = vector.shape_cast %169 : vector<1x256xf32> to vector<1x1x256xf32>
    tpu.vector_store %arg9[%c0_49, %c5, %c0_50], %172 {strides = array<i32>} : memref<2x32x256xf32, #tpu.memory_space<vmem>>, vector<1x1x256xf32>,
    %173 = vector.extract_strided_slice %48 {offsets = [3, 0], sizes = [1, 256], strides = [1, 1]} : vector<16x256xf32> to vector<1x256xf32>
    %c0_51 = arith.constant 0 : index
    %c6 = arith.constant 6 : index
    %c0_52 = arith.constant 0 : index
    %174 = vector.load %arg9[%c0_51, %c6, %c0_52] : memref<2x32x256xf32, #tpu.memory_space<vmem>>, vector<1x1x256xf32>
    %175 = vector.shape_cast %174 : vector<1x1x256xf32> to vector<1x256xf32>
    %176 = vector.shape_cast %173 : vector<1x256xf32> to vector<1x1x256xf32>
    tpu.vector_store %arg9[%c0_51, %c6, %c0_52], %176 {strides = array<i32>} : memref<2x32x256xf32, #tpu.memory_space<vmem>>, vector<1x1x256xf32>,
    %177 = vector.extract_strided_slice %148 {offsets = [3, 0], sizes = [1, 256], strides = [1, 1]} : vector<16x256xf32> to vector<1x256xf32>
    %c0_53 = arith.constant 0 : index
    %c7 = arith.constant 7 : index
    %c0_54 = arith.constant 0 : index
    %178 = vector.load %arg9[%c0_53, %c7, %c0_54] : memref<2x32x256xf32, #tpu.memory_space<vmem>>, vector<1x1x256xf32>
    %179 = vector.shape_cast %178 : vector<1x1x256xf32> to vector<1x256xf32>
    %180 = vector.shape_cast %177 : vector<1x256xf32> to vector<1x1x256xf32>
    tpu.vector_store %arg9[%c0_53, %c7, %c0_54], %180 {strides = array<i32>} : memref<2x32x256xf32, #tpu.memory_space<vmem>>, vector<1x1x256xf32>,
    %181 = vector.extract_strided_slice %48 {offsets = [4, 0], sizes = [1, 256], strides = [1, 1]} : vector<16x256xf32> to vector<1x256xf32>
    %c0_55 = arith.constant 0 : index
    %c8 = arith.constant 8 : index
    %c0_56 = arith.constant 0 : index
    %182 = vector.load %arg9[%c0_55, %c8, %c0_56] : memref<2x32x256xf32, #tpu.memory_space<vmem>>, vector<1x1x256xf32>
    %183 = vector.shape_cast %182 : vector<1x1x256xf32> to vector<1x256xf32>
    %184 = vector.shape_cast %181 : vector<1x256xf32> to vector<1x1x256xf32>
    tpu.vector_store %arg9[%c0_55, %c8, %c0_56], %184 {strides = array<i32>} : memref<2x32x256xf32, #tpu.memory_space<vmem>>, vector<1x1x256xf32>,
    %185 = vector.extract_strided_slice %148 {offsets = [4, 0], sizes = [1, 256], strides = [1, 1]} : vector<16x256xf32> to vector<1x256xf32>
    %c0_57 = arith.constant 0 : index
    %c9 = arith.constant 9 : index
    %c0_58 = arith.constant 0 : index
    %186 = vector.load %arg9[%c0_57, %c9, %c0_58] : memref<2x32x256xf32, #tpu.memory_space<vmem>>, vector<1x1x256xf32>
    %187 = vector.shape_cast %186 : vector<1x1x256xf32> to vector<1x256xf32>
    %188 = vector.shape_cast %185 : vector<1x256xf32> to vector<1x1x256xf32>
    tpu.vector_store %arg9[%c0_57, %c9, %c0_58], %188 {strides = array<i32>} : memref<2x32x256xf32, #tpu.memory_space<vmem>>, vector<1x1x256xf32>,
    %189 = vector.extract_strided_slice %48 {offsets = [5, 0], sizes = [1, 256], strides = [1, 1]} : vector<16x256xf32> to vector<1x256xf32>
    %c0_59 = arith.constant 0 : index
    %c10 = arith.constant 10 : index
    %c0_60 = arith.constant 0 : index
    %190 = vector.load %arg9[%c0_59, %c10, %c0_60] : memref<2x32x256xf32, #tpu.memory_space<vmem>>, vector<1x1x256xf32>
    %191 = vector.shape_cast %190 : vector<1x1x256xf32> to vector<1x256xf32>
    %192 = vector.shape_cast %189 : vector<1x256xf32> to vector<1x1x256xf32>
    tpu.vector_store %arg9[%c0_59, %c10, %c0_60], %192 {strides = array<i32>} : memref<2x32x256xf32, #tpu.memory_space<vmem>>, vector<1x1x256xf32>,
    %193 = vector.extract_strided_slice %148 {offsets = [5, 0], sizes = [1, 256], strides = [1, 1]} : vector<16x256xf32> to vector<1x256xf32>
    %c0_61 = arith.constant 0 : index
    %c11 = arith.constant 11 : index
    %c0_62 = arith.constant 0 : index
    %194 = vector.load %arg9[%c0_61, %c11, %c0_62] : memref<2x32x256xf32, #tpu.memory_space<vmem>>, vector<1x1x256xf32>
    %195 = vector.shape_cast %194 : vector<1x1x256xf32> to vector<1x256xf32>
    %196 = vector.shape_cast %193 : vector<1x256xf32> to vector<1x1x256xf32>
    tpu.vector_store %arg9[%c0_61, %c11, %c0_62], %196 {strides = array<i32>} : memref<2x32x256xf32, #tpu.memory_space<vmem>>, vector<1x1x256xf32>,
    %197 = vector.extract_strided_slice %48 {offsets = [6, 0], sizes = [1, 256], strides = [1, 1]} : vector<16x256xf32> to vector<1x256xf32>
    %c0_63 = arith.constant 0 : index
    %c12 = arith.constant 12 : index
    %c0_64 = arith.constant 0 : index
    %198 = vector.load %arg9[%c0_63, %c12, %c0_64] : memref<2x32x256xf32, #tpu.memory_space<vmem>>, vector<1x1x256xf32>
    %199 = vector.shape_cast %198 : vector<1x1x256xf32> to vector<1x256xf32>
    %200 = vector.shape_cast %197 : vector<1x256xf32> to vector<1x1x256xf32>
    tpu.vector_store %arg9[%c0_63, %c12, %c0_64], %200 {strides = array<i32>} : memref<2x32x256xf32, #tpu.memory_space<vmem>>, vector<1x1x256xf32>,
    %201 = vector.extract_strided_slice %148 {offsets = [6, 0], sizes = [1, 256], strides = [1, 1]} : vector<16x256xf32> to vector<1x256xf32>
    %c0_65 = arith.constant 0 : index
    %c13 = arith.constant 13 : index
    %c0_66 = arith.constant 0 : index
    %202 = vector.load %arg9[%c0_65, %c13, %c0_66] : memref<2x32x256xf32, #tpu.memory_space<vmem>>, vector<1x1x256xf32>
    %203 = vector.shape_cast %202 : vector<1x1x256xf32> to vector<1x256xf32>
    %204 = vector.shape_cast %201 : vector<1x256xf32> to vector<1x1x256xf32>
    tpu.vector_store %arg9[%c0_65, %c13, %c0_66], %204 {strides = array<i32>} : memref<2x32x256xf32, #tpu.memory_space<vmem>>, vector<1x1x256xf32>,
    %205 = vector.extract_strided_slice %48 {offsets = [7, 0], sizes = [1, 256], strides = [1, 1]} : vector<16x256xf32> to vector<1x256xf32>
    %c0_67 = arith.constant 0 : index
    %c14 = arith.constant 14 : index
    %c0_68 = arith.constant 0 : index
    %206 = vector.load %arg9[%c0_67, %c14, %c0_68] : memref<2x32x256xf32, #tpu.memory_space<vmem>>, vector<1x1x256xf32>
    %207 = vector.shape_cast %206 : vector<1x1x256xf32> to vector<1x256xf32>
    %208 = vector.shape_cast %205 : vector<1x256xf32> to vector<1x1x256xf32>
    tpu.vector_store %arg9[%c0_67, %c14, %c0_68], %208 {strides = array<i32>} : memref<2x32x256xf32, #tpu.memory_space<vmem>>, vector<1x1x256xf32>,
    %209 = vector.extract_strided_slice %148 {offsets = [7, 0], sizes = [1, 256], strides = [1, 1]} : vector<16x256xf32> to vector<1x256xf32>
    %c0_69 = arith.constant 0 : index
    %c15 = arith.constant 15 : index
    %c0_70 = arith.constant 0 : index
    %210 = vector.load %arg9[%c0_69, %c15, %c0_70] : memref<2x32x256xf32, #tpu.memory_space<vmem>>, vector<1x1x256xf32>
    %211 = vector.shape_cast %210 : vector<1x1x256xf32> to vector<1x256xf32>
    %212 = vector.shape_cast %209 : vector<1x256xf32> to vector<1x1x256xf32>
    tpu.vector_store %arg9[%c0_69, %c15, %c0_70], %212 {strides = array<i32>} : memref<2x32x256xf32, #tpu.memory_space<vmem>>, vector<1x1x256xf32>,
    %213 = vector.extract_strided_slice %48 {offsets = [8, 0], sizes = [1, 256], strides = [1, 1]} : vector<16x256xf32> to vector<1x256xf32>
    %c0_71 = arith.constant 0 : index
    %c16 = arith.constant 16 : index
    %c0_72 = arith.constant 0 : index
    %214 = vector.load %arg9[%c0_71, %c16, %c0_72] : memref<2x32x256xf32, #tpu.memory_space<vmem>>, vector<1x1x256xf32>
    %215 = vector.shape_cast %214 : vector<1x1x256xf32> to vector<1x256xf32>
    %216 = vector.shape_cast %213 : vector<1x256xf32> to vector<1x1x256xf32>
    tpu.vector_store %arg9[%c0_71, %c16, %c0_72], %216 {strides = array<i32>} : memref<2x32x256xf32, #tpu.memory_space<vmem>>, vector<1x1x256xf32>,
    %217 = vector.extract_strided_slice %148 {offsets = [8, 0], sizes = [1, 256], strides = [1, 1]} : vector<16x256xf32> to vector<1x256xf32>
    %c0_73 = arith.constant 0 : index
    %c17 = arith.constant 17 : index
    %c0_74 = arith.constant 0 : index
    %218 = vector.load %arg9[%c0_73, %c17, %c0_74] : memref<2x32x256xf32, #tpu.memory_space<vmem>>, vector<1x1x256xf32>
    %219 = vector.shape_cast %218 : vector<1x1x256xf32> to vector<1x256xf32>
    %220 = vector.shape_cast %217 : vector<1x256xf32> to vector<1x1x256xf32>
    tpu.vector_store %arg9[%c0_73, %c17, %c0_74], %220 {strides = array<i32>} : memref<2x32x256xf32, #tpu.memory_space<vmem>>, vector<1x1x256xf32>,
    %221 = vector.extract_strided_slice %48 {offsets = [9, 0], sizes = [1, 256], strides = [1, 1]} : vector<16x256xf32> to vector<1x256xf32>
    %c0_75 = arith.constant 0 : index
    %c18 = arith.constant 18 : index
    %c0_76 = arith.constant 0 : index
    %222 = vector.load %arg9[%c0_75, %c18, %c0_76] : memref<2x32x256xf32, #tpu.memory_space<vmem>>, vector<1x1x256xf32>
    %223 = vector.shape_cast %222 : vector<1x1x256xf32> to vector<1x256xf32>
    %224 = vector.shape_cast %221 : vector<1x256xf32> to vector<1x1x256xf32>
    tpu.vector_store %arg9[%c0_75, %c18, %c0_76], %224 {strides = array<i32>} : memref<2x32x256xf32, #tpu.memory_space<vmem>>, vector<1x1x256xf32>,
    %225 = vector.extract_strided_slice %148 {offsets = [9, 0], sizes = [1, 256], strides = [1, 1]} : vector<16x256xf32> to vector<1x256xf32>
    %c0_77 = arith.constant 0 : index
    %c19 = arith.constant 19 : index
    %c0_78 = arith.constant 0 : index
    %226 = vector.load %arg9[%c0_77, %c19, %c0_78] : memref<2x32x256xf32, #tpu.memory_space<vmem>>, vector<1x1x256xf32>
    %227 = vector.shape_cast %226 : vector<1x1x256xf32> to vector<1x256xf32>
    %228 = vector.shape_cast %225 : vector<1x256xf32> to vector<1x1x256xf32>
    tpu.vector_store %arg9[%c0_77, %c19, %c0_78], %228 {strides = array<i32>} : memref<2x32x256xf32, #tpu.memory_space<vmem>>, vector<1x1x256xf32>,
    %229 = vector.extract_strided_slice %48 {offsets = [10, 0], sizes = [1, 256], strides = [1, 1]} : vector<16x256xf32> to vector<1x256xf32>
    %c0_79 = arith.constant 0 : index
    %c20 = arith.constant 20 : index
    %c0_80 = arith.constant 0 : index
    %230 = vector.load %arg9[%c0_79, %c20, %c0_80] : memref<2x32x256xf32, #tpu.memory_space<vmem>>, vector<1x1x256xf32>
    %231 = vector.shape_cast %230 : vector<1x1x256xf32> to vector<1x256xf32>
    %232 = vector.shape_cast %229 : vector<1x256xf32> to vector<1x1x256xf32>
    tpu.vector_store %arg9[%c0_79, %c20, %c0_80], %232 {strides = array<i32>} : memref<2x32x256xf32, #tpu.memory_space<vmem>>, vector<1x1x256xf32>,
    %233 = vector.extract_strided_slice %148 {offsets = [10, 0], sizes = [1, 256], strides = [1, 1]} : vector<16x256xf32> to vector<1x256xf32>
    %c0_81 = arith.constant 0 : index
    %c21 = arith.constant 21 : index
    %c0_82 = arith.constant 0 : index
    %234 = vector.load %arg9[%c0_81, %c21, %c0_82] : memref<2x32x256xf32, #tpu.memory_space<vmem>>, vector<1x1x256xf32>
    %235 = vector.shape_cast %234 : vector<1x1x256xf32> to vector<1x256xf32>
    %236 = vector.shape_cast %233 : vector<1x256xf32> to vector<1x1x256xf32>
    tpu.vector_store %arg9[%c0_81, %c21, %c0_82], %236 {strides = array<i32>} : memref<2x32x256xf32, #tpu.memory_space<vmem>>, vector<1x1x256xf32>,
    %237 = vector.extract_strided_slice %48 {offsets = [11, 0], sizes = [1, 256], strides = [1, 1]} : vector<16x256xf32> to vector<1x256xf32>
    %c0_83 = arith.constant 0 : index
    %c22 = arith.constant 22 : index
    %c0_84 = arith.constant 0 : index
    %238 = vector.load %arg9[%c0_83, %c22, %c0_84] : memref<2x32x256xf32, #tpu.memory_space<vmem>>, vector<1x1x256xf32>
    %239 = vector.shape_cast %238 : vector<1x1x256xf32> to vector<1x256xf32>
    %240 = vector.shape_cast %237 : vector<1x256xf32> to vector<1x1x256xf32>
    tpu.vector_store %arg9[%c0_83, %c22, %c0_84], %240 {strides = array<i32>} : memref<2x32x256xf32, #tpu.memory_space<vmem>>, vector<1x1x256xf32>,
    %241 = vector.extract_strided_slice %148 {offsets = [11, 0], sizes = [1, 256], strides = [1, 1]} : vector<16x256xf32> to vector<1x256xf32>
    %c0_85 = arith.constant 0 : index
    %c23 = arith.constant 23 : index
    %c0_86 = arith.constant 0 : index
    %242 = vector.load %arg9[%c0_85, %c23, %c0_86] : memref<2x32x256xf32, #tpu.memory_space<vmem>>, vector<1x1x256xf32>
    %243 = vector.shape_cast %242 : vector<1x1x256xf32> to vector<1x256xf32>
    %244 = vector.shape_cast %241 : vector<1x256xf32> to vector<1x1x256xf32>
    tpu.vector_store %arg9[%c0_85, %c23, %c0_86], %244 {strides = array<i32>} : memref<2x32x256xf32, #tpu.memory_space<vmem>>, vector<1x1x256xf32>,
    %245 = vector.extract_strided_slice %48 {offsets = [12, 0], sizes = [1, 256], strides = [1, 1]} : vector<16x256xf32> to vector<1x256xf32>
    %c0_87 = arith.constant 0 : index
    %c24 = arith.constant 24 : index
    %c0_88 = arith.constant 0 : index
    %246 = vector.load %arg9[%c0_87, %c24, %c0_88] : memref<2x32x256xf32, #tpu.memory_space<vmem>>, vector<1x1x256xf32>
    %247 = vector.shape_cast %246 : vector<1x1x256xf32> to vector<1x256xf32>
    %248 = vector.shape_cast %245 : vector<1x256xf32> to vector<1x1x256xf32>
    tpu.vector_store %arg9[%c0_87, %c24, %c0_88], %248 {strides = array<i32>} : memref<2x32x256xf32, #tpu.memory_space<vmem>>, vector<1x1x256xf32>,
    %249 = vector.extract_strided_slice %148 {offsets = [12, 0], sizes = [1, 256], strides = [1, 1]} : vector<16x256xf32> to vector<1x256xf32>
    %c0_89 = arith.constant 0 : index
    %c25 = arith.constant 25 : index
    %c0_90 = arith.constant 0 : index
    %250 = vector.load %arg9[%c0_89, %c25, %c0_90] : memref<2x32x256xf32, #tpu.memory_space<vmem>>, vector<1x1x256xf32>
    %251 = vector.shape_cast %250 : vector<1x1x256xf32> to vector<1x256xf32>
    %252 = vector.shape_cast %249 : vector<1x256xf32> to vector<1x1x256xf32>
    tpu.vector_store %arg9[%c0_89, %c25, %c0_90], %252 {strides = array<i32>} : memref<2x32x256xf32, #tpu.memory_space<vmem>>, vector<1x1x256xf32>,
    %253 = vector.extract_strided_slice %48 {offsets = [13, 0], sizes = [1, 256], strides = [1, 1]} : vector<16x256xf32> to vector<1x256xf32>
    %c0_91 = arith.constant 0 : index
    %c26 = arith.constant 26 : index
    %c0_92 = arith.constant 0 : index
    %254 = vector.load %arg9[%c0_91, %c26, %c0_92] : memref<2x32x256xf32, #tpu.memory_space<vmem>>, vector<1x1x256xf32>
    %255 = vector.shape_cast %254 : vector<1x1x256xf32> to vector<1x256xf32>
    %256 = vector.shape_cast %253 : vector<1x256xf32> to vector<1x1x256xf32>
    tpu.vector_store %arg9[%c0_91, %c26, %c0_92], %256 {strides = array<i32>} : memref<2x32x256xf32, #tpu.memory_space<vmem>>, vector<1x1x256xf32>,
    %257 = vector.extract_strided_slice %148 {offsets = [13, 0], sizes = [1, 256], strides = [1, 1]} : vector<16x256xf32> to vector<1x256xf32>
    %c0_93 = arith.constant 0 : index
    %c27 = arith.constant 27 : index
    %c0_94 = arith.constant 0 : index
    %258 = vector.load %arg9[%c0_93, %c27, %c0_94] : memref<2x32x256xf32, #tpu.memory_space<vmem>>, vector<1x1x256xf32>
    %259 = vector.shape_cast %258 : vector<1x1x256xf32> to vector<1x256xf32>
    %260 = vector.shape_cast %257 : vector<1x256xf32> to vector<1x1x256xf32>
    tpu.vector_store %arg9[%c0_93, %c27, %c0_94], %260 {strides = array<i32>} : memref<2x32x256xf32, #tpu.memory_space<vmem>>, vector<1x1x256xf32>,
    %261 = vector.extract_strided_slice %48 {offsets = [14, 0], sizes = [1, 256], strides = [1, 1]} : vector<16x256xf32> to vector<1x256xf32>
    %c0_95 = arith.constant 0 : index
    %c28 = arith.constant 28 : index
    %c0_96 = arith.constant 0 : index
    %262 = vector.load %arg9[%c0_95, %c28, %c0_96] : memref<2x32x256xf32, #tpu.memory_space<vmem>>, vector<1x1x256xf32>
    %263 = vector.shape_cast %262 : vector<1x1x256xf32> to vector<1x256xf32>
    %264 = vector.shape_cast %261 : vector<1x256xf32> to vector<1x1x256xf32>
    tpu.vector_store %arg9[%c0_95, %c28, %c0_96], %264 {strides = array<i32>} : memref<2x32x256xf32, #tpu.memory_space<vmem>>, vector<1x1x256xf32>,
    %265 = vector.extract_strided_slice %148 {offsets = [14, 0], sizes = [1, 256], strides = [1, 1]} : vector<16x256xf32> to vector<1x256xf32>
    %c0_97 = arith.constant 0 : index
    %c29 = arith.constant 29 : index
    %c0_98 = arith.constant 0 : index
    %266 = vector.load %arg9[%c0_97, %c29, %c0_98] : memref<2x32x256xf32, #tpu.memory_space<vmem>>, vector<1x1x256xf32>
    %267 = vector.shape_cast %266 : vector<1x1x256xf32> to vector<1x256xf32>
    %268 = vector.shape_cast %265 : vector<1x256xf32> to vector<1x1x256xf32>
    tpu.vector_store %arg9[%c0_97, %c29, %c0_98], %268 {strides = array<i32>} : memref<2x32x256xf32, #tpu.memory_space<vmem>>, vector<1x1x256xf32>,
    %269 = vector.extract_strided_slice %48 {offsets = [15, 0], sizes = [1, 256], strides = [1, 1]} : vector<16x256xf32> to vector<1x256xf32>
    %c0_99 = arith.constant 0 : index
    %c30 = arith.constant 30 : index
    %c0_100 = arith.constant 0 : index
    %270 = vector.load %arg9[%c0_99, %c30, %c0_100] : memref<2x32x256xf32, #tpu.memory_space<vmem>>, vector<1x1x256xf32>
    %271 = vector.shape_cast %270 : vector<1x1x256xf32> to vector<1x256xf32>
    %272 = vector.shape_cast %269 : vector<1x256xf32> to vector<1x1x256xf32>
    tpu.vector_store %arg9[%c0_99, %c30, %c0_100], %272 {strides = array<i32>} : memref<2x32x256xf32, #tpu.memory_space<vmem>>, vector<1x1x256xf32>,
    %273 = vector.extract_strided_slice %148 {offsets = [15, 0], sizes = [1, 256], strides = [1, 1]} : vector<16x256xf32> to vector<1x256xf32>
    %c0_101 = arith.constant 0 : index
    %c31 = arith.constant 31 : index
    %c0_102 = arith.constant 0 : index
    %274 = vector.load %arg9[%c0_101, %c31, %c0_102] : memref<2x32x256xf32, #tpu.memory_space<vmem>>, vector<1x1x256xf32>
    %275 = vector.shape_cast %274 : vector<1x1x256xf32> to vector<1x256xf32>
    %276 = vector.shape_cast %273 : vector<1x256xf32> to vector<1x1x256xf32>
    tpu.vector_store %arg9[%c0_101, %c31, %c0_102], %276 {strides = array<i32>} : memref<2x32x256xf32, #tpu.memory_space<vmem>>, vector<1x1x256xf32>,
    %c1_103 = arith.constant 1 : index
    %c0_104 = arith.constant 0 : index
    %c0_105 = arith.constant 0 : index
    %277 = vector.load %arg1[%c1_103, %c0_104, %c0_105] : memref<2x32x256xf32, #tpu.memory_space<vmem>>, vector<1x32x256xf32>
    %278 = vector.shape_cast %277 : vector<1x32x256xf32> to vector<32x256xf32>
    %279 = vector.extract_strided_slice %278 {offsets = [0, 0], sizes = [16, 256], strides = [1, 1]} : vector<32x256xf32> to vector<16x256xf32>
    %280 = vector.extract_strided_slice %278 {offsets = [16, 0], sizes = [16, 256], strides = [1, 1]} : vector<32x256xf32> to vector<16x256xf32>
    %c1_106 = arith.constant 1 : index
    %c0_107 = arith.constant 0 : index
    %c0_108 = arith.constant 0 : index
    %281 = vector.load %arg2[%c1_106, %c0_107, %c0_108] : memref<2x16x256xf32, #tpu.memory_space<vmem>>, vector<1x16x256xf32>
    %282 = vector.shape_cast %281 : vector<1x16x256xf32> to vector<16x256xf32>
    %283 = arith.mulf %280, %282 : vector<16x256xf32>
    %cst_109 = arith.constant 0.000000e+00 : f32
    %284 = vector.broadcast %cst_109 : f32 to vector<16x256xf32>
    %c17_i32_110 = arith.constant 17 : i32
    %285 = tpu.dynamic_rotate %283 by %c17_i32_110 dim 1 : vector<16x256xf32>, i32 -> vector<16x256xf32>
    %286 = arith.andi %4, %8 : vector<1x256xi1>
    %cst_111 = arith.constant 0.000000e+00 : f32
    %287 = vector.shape_cast %286 : vector<1x256xi1> to vector<1x256xi1>
    %288 = vector.broadcast %287 : vector<1x256xi1> to vector<16x256xi1>
    %289 = vector.broadcast %cst_111 : f32 to vector<16x256xf32>
    %290 = arith.select %288, %285, %289 : vector<16x256xi1>, vector<16x256xf32>
    %291 = arith.mulf %290, %14 : vector<16x256xf32>
    %292 = arith.addf %284, %291 : vector<16x256xf32>
    %c16_i32_112 = arith.constant 16 : i32
    %293 = tpu.dynamic_rotate %283 by %c16_i32_112 dim 1 : vector<16x256xf32>, i32 -> vector<16x256xf32>
    %cst_113 = arith.constant 0.000000e+00 : f32
    %294 = vector.shape_cast %4 : vector<1x256xi1> to vector<1x256xi1>
    %295 = vector.broadcast %294 : vector<1x256xi1> to vector<16x256xi1>
    %296 = vector.broadcast %cst_113 : f32 to vector<16x256xf32>
    %297 = arith.select %295, %293, %296 : vector<16x256xi1>, vector<16x256xf32>
    %298 = arith.mulf %297, %17 : vector<16x256xf32>
    %299 = arith.addf %292, %298 : vector<16x256xf32>
    %c15_i32_114 = arith.constant 15 : i32
    %300 = tpu.dynamic_rotate %283 by %c15_i32_114 dim 1 : vector<16x256xf32>, i32 -> vector<16x256xf32>
    %301 = arith.andi %4, %10 : vector<1x256xi1>
    %cst_115 = arith.constant 0.000000e+00 : f32
    %302 = vector.shape_cast %301 : vector<1x256xi1> to vector<1x256xi1>
    %303 = vector.broadcast %302 : vector<1x256xi1> to vector<16x256xi1>
    %304 = vector.broadcast %cst_115 : f32 to vector<16x256xf32>
    %305 = arith.select %303, %300, %304 : vector<16x256xi1>, vector<16x256xf32>
    %306 = arith.mulf %305, %20 : vector<16x256xf32>
    %307 = arith.addf %299, %306 : vector<16x256xf32>
    %c1_i32_116 = arith.constant 1 : i32
    %308 = tpu.dynamic_rotate %283 by %c1_i32_116 dim 1 : vector<16x256xf32>, i32 -> vector<16x256xf32>
    %cst_117 = arith.constant 0.000000e+00 : f32
    %309 = vector.shape_cast %8 : vector<1x256xi1> to vector<1x256xi1>
    %310 = vector.broadcast %309 : vector<1x256xi1> to vector<16x256xi1>
    %311 = vector.broadcast %cst_117 : f32 to vector<16x256xf32>
    %312 = arith.select %310, %308, %311 : vector<16x256xi1>, vector<16x256xf32>
    %313 = arith.mulf %312, %23 : vector<16x256xf32>
    %314 = arith.addf %307, %313 : vector<16x256xf32>
    %315 = arith.mulf %283, %26 : vector<16x256xf32>
    %316 = arith.addf %314, %315 : vector<16x256xf32>
    %c255_i32_118 = arith.constant 255 : i32
    %317 = tpu.dynamic_rotate %283 by %c255_i32_118 dim 1 : vector<16x256xf32>, i32 -> vector<16x256xf32>
    %cst_119 = arith.constant 0.000000e+00 : f32
    %318 = vector.shape_cast %10 : vector<1x256xi1> to vector<1x256xi1>
    %319 = vector.broadcast %318 : vector<1x256xi1> to vector<16x256xi1>
    %320 = vector.broadcast %cst_119 : f32 to vector<16x256xf32>
    %321 = arith.select %319, %317, %320 : vector<16x256xi1>, vector<16x256xf32>
    %322 = arith.mulf %321, %29 : vector<16x256xf32>
    %323 = arith.addf %316, %322 : vector<16x256xf32>
    %c241_i32_120 = arith.constant 241 : i32
    %324 = tpu.dynamic_rotate %283 by %c241_i32_120 dim 1 : vector<16x256xf32>, i32 -> vector<16x256xf32>
    %325 = arith.andi %6, %8 : vector<1x256xi1>
    %cst_121 = arith.constant 0.000000e+00 : f32
    %326 = vector.shape_cast %325 : vector<1x256xi1> to vector<1x256xi1>
    %327 = vector.broadcast %326 : vector<1x256xi1> to vector<16x256xi1>
    %328 = vector.broadcast %cst_121 : f32 to vector<16x256xf32>
    %329 = arith.select %327, %324, %328 : vector<16x256xi1>, vector<16x256xf32>
    %330 = arith.mulf %329, %32 : vector<16x256xf32>
    %331 = arith.addf %323, %330 : vector<16x256xf32>
    %c240_i32_122 = arith.constant 240 : i32
    %332 = tpu.dynamic_rotate %283 by %c240_i32_122 dim 1 : vector<16x256xf32>, i32 -> vector<16x256xf32>
    %cst_123 = arith.constant 0.000000e+00 : f32
    %333 = vector.shape_cast %6 : vector<1x256xi1> to vector<1x256xi1>
    %334 = vector.broadcast %333 : vector<1x256xi1> to vector<16x256xi1>
    %335 = vector.broadcast %cst_123 : f32 to vector<16x256xf32>
    %336 = arith.select %334, %332, %335 : vector<16x256xi1>, vector<16x256xf32>
    %337 = arith.mulf %336, %35 : vector<16x256xf32>
    %338 = arith.addf %331, %337 : vector<16x256xf32>
    %c239_i32_124 = arith.constant 239 : i32
    %339 = tpu.dynamic_rotate %283 by %c239_i32_124 dim 1 : vector<16x256xf32>, i32 -> vector<16x256xf32>
    %340 = arith.andi %6, %10 : vector<1x256xi1>
    %cst_125 = arith.constant 0.000000e+00 : f32
    %341 = vector.shape_cast %340 : vector<1x256xi1> to vector<1x256xi1>
    %342 = vector.broadcast %341 : vector<1x256xi1> to vector<16x256xi1>
    %343 = vector.broadcast %cst_125 : f32 to vector<16x256xf32>
    %344 = arith.select %342, %339, %343 : vector<16x256xi1>, vector<16x256xf32>
    %345 = arith.mulf %344, %38 : vector<16x256xf32>
    %346 = arith.addf %338, %345 : vector<16x256xf32>
    %347 = arith.addf %346, %41 : vector<16x256xf32>
    %cst_126 = arith.constant 0.000000e+00 : f32
    %348 = vector.broadcast %cst_126 : f32 to vector<16x256xf32>
    %349 = arith.maximumf %347, %348 : vector<16x256xf32>
    %cst_127 = arith.constant dense<0.000000e+00> : vector<16xf32>
    %350 = vector.multi_reduction <add>, %349, %cst_127 [1] : vector<16x256xf32> to vector<16xf32>
    %351 = vector.shape_cast %350 : vector<16xf32> to vector<16x1xf32>
    %cst_128 = arith.constant 3.906250e-03 : f32
    %352 = vector.broadcast %cst_128 : f32 to vector<16x1xf32>
    %353 = arith.mulf %351, %352 : vector<16x1xf32>
    %354 = vector.broadcast %353 : vector<16x1xf32> to vector<16x2xf32>
    %355 = arith.mulf %354, %42 : vector<16x2xf32>
    %cst_129 = arith.constant dense<0.000000e+00> : vector<2xf32>
    %356 = vector.multi_reduction <add>, %355, %cst_129 [0] : vector<16x2xf32> to vector<2xf32>
    %357 = vector.shape_cast %356 : vector<2xf32> to vector<1x2xf32>
    %358 = arith.addf %357, %43 : vector<1x2xf32>
    %cst_130 = arith.constant 0.000000e+00 : f32
    %359 = vector.broadcast %cst_130 : f32 to vector<1x2xf32>
    %360 = arith.maximumf %358, %359 : vector<1x2xf32>
    %361 = vector.extract_strided_slice %360 {offsets = [0, 0], sizes = [1, 1], strides = [1, 1]} : vector<1x2xf32> to vector<1x1xf32>
    %362 = vector.extract_strided_slice %44 {offsets = [0, 0], sizes = [16, 1], strides = [1, 1]} : vector<16x2xf32> to vector<16x1xf32>
    %363 = vector.broadcast %361 : vector<1x1xf32> to vector<16x1xf32>
    %364 = arith.mulf %363, %362 : vector<16x1xf32>
    %365 = arith.addf %45, %364 : vector<16x1xf32>
    %366 = vector.extract_strided_slice %360 {offsets = [0, 1], sizes = [1, 1], strides = [1, 1]} : vector<1x2xf32> to vector<1x1xf32>
    %367 = vector.extract_strided_slice %44 {offsets = [0, 1], sizes = [16, 1], strides = [1, 1]} : vector<16x2xf32> to vector<16x1xf32>
    %368 = vector.broadcast %366 : vector<1x1xf32> to vector<16x1xf32>
    %369 = arith.mulf %368, %367 : vector<16x1xf32>
    %370 = arith.addf %365, %369 : vector<16x1xf32>
    %cst_131 = arith.constant 0.000000e+00 : f32
    %371 = vector.broadcast %cst_131 : f32 to vector<16x1xf32>
    %372 = arith.subf %371, %370 : vector<16x1xf32>
    %373 = math.exp %372 : vector<16x1xf32>
    %cst_132 = arith.constant 1.000000e+00 : f32
    %374 = vector.broadcast %cst_132 : f32 to vector<16x1xf32>
    %375 = arith.addf %374, %373 : vector<16x1xf32>
    %cst_133 = arith.constant 1.000000e+00 : f32
    %376 = vector.broadcast %cst_133 : f32 to vector<16x1xf32>
    %377 = arith.divf %376, %375 : vector<16x1xf32>
    %378 = vector.broadcast %377 : vector<16x1xf32> to vector<16x256xf32>
    %379 = arith.mulf %349, %378 : vector<16x256xf32>
    %380 = vector.extract_strided_slice %279 {offsets = [0, 0], sizes = [1, 256], strides = [1, 1]} : vector<16x256xf32> to vector<1x256xf32>
    %c1_134 = arith.constant 1 : index
    %c0_135 = arith.constant 0 : index
    %c0_136 = arith.constant 0 : index
    %381 = vector.load %arg9[%c1_134, %c0_135, %c0_136] : memref<2x32x256xf32, #tpu.memory_space<vmem>>, vector<1x1x256xf32>
    %382 = vector.shape_cast %381 : vector<1x1x256xf32> to vector<1x256xf32>
    %383 = vector.shape_cast %380 : vector<1x256xf32> to vector<1x1x256xf32>
    tpu.vector_store %arg9[%c1_134, %c0_135, %c0_136], %383 {strides = array<i32>} : memref<2x32x256xf32, #tpu.memory_space<vmem>>, vector<1x1x256xf32>,
    %384 = vector.extract_strided_slice %379 {offsets = [0, 0], sizes = [1, 256], strides = [1, 1]} : vector<16x256xf32> to vector<1x256xf32>
    %c1_137 = arith.constant 1 : index
    %c1_138 = arith.constant 1 : index
    %c0_139 = arith.constant 0 : index
    %385 = vector.load %arg9[%c1_137, %c1_138, %c0_139] : memref<2x32x256xf32, #tpu.memory_space<vmem>>, vector<1x1x256xf32>
    %386 = vector.shape_cast %385 : vector<1x1x256xf32> to vector<1x256xf32>
    %387 = vector.shape_cast %384 : vector<1x256xf32> to vector<1x1x256xf32>
    tpu.vector_store %arg9[%c1_137, %c1_138, %c0_139], %387 {strides = array<i32>} : memref<2x32x256xf32, #tpu.memory_space<vmem>>, vector<1x1x256xf32>,
    %388 = vector.extract_strided_slice %279 {offsets = [1, 0], sizes = [1, 256], strides = [1, 1]} : vector<16x256xf32> to vector<1x256xf32>
    %c1_140 = arith.constant 1 : index
    %c2_141 = arith.constant 2 : index
    %c0_142 = arith.constant 0 : index
    %389 = vector.load %arg9[%c1_140, %c2_141, %c0_142] : memref<2x32x256xf32, #tpu.memory_space<vmem>>, vector<1x1x256xf32>
    %390 = vector.shape_cast %389 : vector<1x1x256xf32> to vector<1x256xf32>
    %391 = vector.shape_cast %388 : vector<1x256xf32> to vector<1x1x256xf32>
    tpu.vector_store %arg9[%c1_140, %c2_141, %c0_142], %391 {strides = array<i32>} : memref<2x32x256xf32, #tpu.memory_space<vmem>>, vector<1x1x256xf32>,
    %392 = vector.extract_strided_slice %379 {offsets = [1, 0], sizes = [1, 256], strides = [1, 1]} : vector<16x256xf32> to vector<1x256xf32>
    %c1_143 = arith.constant 1 : index
    %c3_144 = arith.constant 3 : index
    %c0_145 = arith.constant 0 : index
    %393 = vector.load %arg9[%c1_143, %c3_144, %c0_145] : memref<2x32x256xf32, #tpu.memory_space<vmem>>, vector<1x1x256xf32>
    %394 = vector.shape_cast %393 : vector<1x1x256xf32> to vector<1x256xf32>
    %395 = vector.shape_cast %392 : vector<1x256xf32> to vector<1x1x256xf32>
    tpu.vector_store %arg9[%c1_143, %c3_144, %c0_145], %395 {strides = array<i32>} : memref<2x32x256xf32, #tpu.memory_space<vmem>>, vector<1x1x256xf32>,
    %396 = vector.extract_strided_slice %279 {offsets = [2, 0], sizes = [1, 256], strides = [1, 1]} : vector<16x256xf32> to vector<1x256xf32>
    %c1_146 = arith.constant 1 : index
    %c4_147 = arith.constant 4 : index
    %c0_148 = arith.constant 0 : index
    %397 = vector.load %arg9[%c1_146, %c4_147, %c0_148] : memref<2x32x256xf32, #tpu.memory_space<vmem>>, vector<1x1x256xf32>
    %398 = vector.shape_cast %397 : vector<1x1x256xf32> to vector<1x256xf32>
    %399 = vector.shape_cast %396 : vector<1x256xf32> to vector<1x1x256xf32>
    tpu.vector_store %arg9[%c1_146, %c4_147, %c0_148], %399 {strides = array<i32>} : memref<2x32x256xf32, #tpu.memory_space<vmem>>, vector<1x1x256xf32>,
    %400 = vector.extract_strided_slice %379 {offsets = [2, 0], sizes = [1, 256], strides = [1, 1]} : vector<16x256xf32> to vector<1x256xf32>
    %c1_149 = arith.constant 1 : index
    %c5_150 = arith.constant 5 : index
    %c0_151 = arith.constant 0 : index
    %401 = vector.load %arg9[%c1_149, %c5_150, %c0_151] : memref<2x32x256xf32, #tpu.memory_space<vmem>>, vector<1x1x256xf32>
    %402 = vector.shape_cast %401 : vector<1x1x256xf32> to vector<1x256xf32>
    %403 = vector.shape_cast %400 : vector<1x256xf32> to vector<1x1x256xf32>
    tpu.vector_store %arg9[%c1_149, %c5_150, %c0_151], %403 {strides = array<i32>} : memref<2x32x256xf32, #tpu.memory_space<vmem>>, vector<1x1x256xf32>,
    %404 = vector.extract_strided_slice %279 {offsets = [3, 0], sizes = [1, 256], strides = [1, 1]} : vector<16x256xf32> to vector<1x256xf32>
    %c1_152 = arith.constant 1 : index
    %c6_153 = arith.constant 6 : index
    %c0_154 = arith.constant 0 : index
    %405 = vector.load %arg9[%c1_152, %c6_153, %c0_154] : memref<2x32x256xf32, #tpu.memory_space<vmem>>, vector<1x1x256xf32>
    %406 = vector.shape_cast %405 : vector<1x1x256xf32> to vector<1x256xf32>
    %407 = vector.shape_cast %404 : vector<1x256xf32> to vector<1x1x256xf32>
    tpu.vector_store %arg9[%c1_152, %c6_153, %c0_154], %407 {strides = array<i32>} : memref<2x32x256xf32, #tpu.memory_space<vmem>>, vector<1x1x256xf32>,
    %408 = vector.extract_strided_slice %379 {offsets = [3, 0], sizes = [1, 256], strides = [1, 1]} : vector<16x256xf32> to vector<1x256xf32>
    %c1_155 = arith.constant 1 : index
    %c7_156 = arith.constant 7 : index
    %c0_157 = arith.constant 0 : index
    %409 = vector.load %arg9[%c1_155, %c7_156, %c0_157] : memref<2x32x256xf32, #tpu.memory_space<vmem>>, vector<1x1x256xf32>
    %410 = vector.shape_cast %409 : vector<1x1x256xf32> to vector<1x256xf32>
    %411 = vector.shape_cast %408 : vector<1x256xf32> to vector<1x1x256xf32>
    tpu.vector_store %arg9[%c1_155, %c7_156, %c0_157], %411 {strides = array<i32>} : memref<2x32x256xf32, #tpu.memory_space<vmem>>, vector<1x1x256xf32>,
    %412 = vector.extract_strided_slice %279 {offsets = [4, 0], sizes = [1, 256], strides = [1, 1]} : vector<16x256xf32> to vector<1x256xf32>
    %c1_158 = arith.constant 1 : index
    %c8_159 = arith.constant 8 : index
    %c0_160 = arith.constant 0 : index
    %413 = vector.load %arg9[%c1_158, %c8_159, %c0_160] : memref<2x32x256xf32, #tpu.memory_space<vmem>>, vector<1x1x256xf32>
    %414 = vector.shape_cast %413 : vector<1x1x256xf32> to vector<1x256xf32>
    %415 = vector.shape_cast %412 : vector<1x256xf32> to vector<1x1x256xf32>
    tpu.vector_store %arg9[%c1_158, %c8_159, %c0_160], %415 {strides = array<i32>} : memref<2x32x256xf32, #tpu.memory_space<vmem>>, vector<1x1x256xf32>,
    %416 = vector.extract_strided_slice %379 {offsets = [4, 0], sizes = [1, 256], strides = [1, 1]} : vector<16x256xf32> to vector<1x256xf32>
    %c1_161 = arith.constant 1 : index
    %c9_162 = arith.constant 9 : index
    %c0_163 = arith.constant 0 : index
    %417 = vector.load %arg9[%c1_161, %c9_162, %c0_163] : memref<2x32x256xf32, #tpu.memory_space<vmem>>, vector<1x1x256xf32>
    %418 = vector.shape_cast %417 : vector<1x1x256xf32> to vector<1x256xf32>
    %419 = vector.shape_cast %416 : vector<1x256xf32> to vector<1x1x256xf32>
    tpu.vector_store %arg9[%c1_161, %c9_162, %c0_163], %419 {strides = array<i32>} : memref<2x32x256xf32, #tpu.memory_space<vmem>>, vector<1x1x256xf32>,
    %420 = vector.extract_strided_slice %279 {offsets = [5, 0], sizes = [1, 256], strides = [1, 1]} : vector<16x256xf32> to vector<1x256xf32>
    %c1_164 = arith.constant 1 : index
    %c10_165 = arith.constant 10 : index
    %c0_166 = arith.constant 0 : index
    %421 = vector.load %arg9[%c1_164, %c10_165, %c0_166] : memref<2x32x256xf32, #tpu.memory_space<vmem>>, vector<1x1x256xf32>
    %422 = vector.shape_cast %421 : vector<1x1x256xf32> to vector<1x256xf32>
    %423 = vector.shape_cast %420 : vector<1x256xf32> to vector<1x1x256xf32>
    tpu.vector_store %arg9[%c1_164, %c10_165, %c0_166], %423 {strides = array<i32>} : memref<2x32x256xf32, #tpu.memory_space<vmem>>, vector<1x1x256xf32>,
    %424 = vector.extract_strided_slice %379 {offsets = [5, 0], sizes = [1, 256], strides = [1, 1]} : vector<16x256xf32> to vector<1x256xf32>
    %c1_167 = arith.constant 1 : index
    %c11_168 = arith.constant 11 : index
    %c0_169 = arith.constant 0 : index
    %425 = vector.load %arg9[%c1_167, %c11_168, %c0_169] : memref<2x32x256xf32, #tpu.memory_space<vmem>>, vector<1x1x256xf32>
    %426 = vector.shape_cast %425 : vector<1x1x256xf32> to vector<1x256xf32>
    %427 = vector.shape_cast %424 : vector<1x256xf32> to vector<1x1x256xf32>
    tpu.vector_store %arg9[%c1_167, %c11_168, %c0_169], %427 {strides = array<i32>} : memref<2x32x256xf32, #tpu.memory_space<vmem>>, vector<1x1x256xf32>,
    %428 = vector.extract_strided_slice %279 {offsets = [6, 0], sizes = [1, 256], strides = [1, 1]} : vector<16x256xf32> to vector<1x256xf32>
    %c1_170 = arith.constant 1 : index
    %c12_171 = arith.constant 12 : index
    %c0_172 = arith.constant 0 : index
    %429 = vector.load %arg9[%c1_170, %c12_171, %c0_172] : memref<2x32x256xf32, #tpu.memory_space<vmem>>, vector<1x1x256xf32>
    %430 = vector.shape_cast %429 : vector<1x1x256xf32> to vector<1x256xf32>
    %431 = vector.shape_cast %428 : vector<1x256xf32> to vector<1x1x256xf32>
    tpu.vector_store %arg9[%c1_170, %c12_171, %c0_172], %431 {strides = array<i32>} : memref<2x32x256xf32, #tpu.memory_space<vmem>>, vector<1x1x256xf32>,
    %432 = vector.extract_strided_slice %379 {offsets = [6, 0], sizes = [1, 256], strides = [1, 1]} : vector<16x256xf32> to vector<1x256xf32>
    %c1_173 = arith.constant 1 : index
    %c13_174 = arith.constant 13 : index
    %c0_175 = arith.constant 0 : index
    %433 = vector.load %arg9[%c1_173, %c13_174, %c0_175] : memref<2x32x256xf32, #tpu.memory_space<vmem>>, vector<1x1x256xf32>
    %434 = vector.shape_cast %433 : vector<1x1x256xf32> to vector<1x256xf32>
    %435 = vector.shape_cast %432 : vector<1x256xf32> to vector<1x1x256xf32>
    tpu.vector_store %arg9[%c1_173, %c13_174, %c0_175], %435 {strides = array<i32>} : memref<2x32x256xf32, #tpu.memory_space<vmem>>, vector<1x1x256xf32>,
    %436 = vector.extract_strided_slice %279 {offsets = [7, 0], sizes = [1, 256], strides = [1, 1]} : vector<16x256xf32> to vector<1x256xf32>
    %c1_176 = arith.constant 1 : index
    %c14_177 = arith.constant 14 : index
    %c0_178 = arith.constant 0 : index
    %437 = vector.load %arg9[%c1_176, %c14_177, %c0_178] : memref<2x32x256xf32, #tpu.memory_space<vmem>>, vector<1x1x256xf32>
    %438 = vector.shape_cast %437 : vector<1x1x256xf32> to vector<1x256xf32>
    %439 = vector.shape_cast %436 : vector<1x256xf32> to vector<1x1x256xf32>
    tpu.vector_store %arg9[%c1_176, %c14_177, %c0_178], %439 {strides = array<i32>} : memref<2x32x256xf32, #tpu.memory_space<vmem>>, vector<1x1x256xf32>,
    %440 = vector.extract_strided_slice %379 {offsets = [7, 0], sizes = [1, 256], strides = [1, 1]} : vector<16x256xf32> to vector<1x256xf32>
    %c1_179 = arith.constant 1 : index
    %c15_180 = arith.constant 15 : index
    %c0_181 = arith.constant 0 : index
    %441 = vector.load %arg9[%c1_179, %c15_180, %c0_181] : memref<2x32x256xf32, #tpu.memory_space<vmem>>, vector<1x1x256xf32>
    %442 = vector.shape_cast %441 : vector<1x1x256xf32> to vector<1x256xf32>
    %443 = vector.shape_cast %440 : vector<1x256xf32> to vector<1x1x256xf32>
    tpu.vector_store %arg9[%c1_179, %c15_180, %c0_181], %443 {strides = array<i32>} : memref<2x32x256xf32, #tpu.memory_space<vmem>>, vector<1x1x256xf32>,
    %444 = vector.extract_strided_slice %279 {offsets = [8, 0], sizes = [1, 256], strides = [1, 1]} : vector<16x256xf32> to vector<1x256xf32>
    %c1_182 = arith.constant 1 : index
    %c16_183 = arith.constant 16 : index
    %c0_184 = arith.constant 0 : index
    %445 = vector.load %arg9[%c1_182, %c16_183, %c0_184] : memref<2x32x256xf32, #tpu.memory_space<vmem>>, vector<1x1x256xf32>
    %446 = vector.shape_cast %445 : vector<1x1x256xf32> to vector<1x256xf32>
    %447 = vector.shape_cast %444 : vector<1x256xf32> to vector<1x1x256xf32>
    tpu.vector_store %arg9[%c1_182, %c16_183, %c0_184], %447 {strides = array<i32>} : memref<2x32x256xf32, #tpu.memory_space<vmem>>, vector<1x1x256xf32>,
    %448 = vector.extract_strided_slice %379 {offsets = [8, 0], sizes = [1, 256], strides = [1, 1]} : vector<16x256xf32> to vector<1x256xf32>
    %c1_185 = arith.constant 1 : index
    %c17_186 = arith.constant 17 : index
    %c0_187 = arith.constant 0 : index
    %449 = vector.load %arg9[%c1_185, %c17_186, %c0_187] : memref<2x32x256xf32, #tpu.memory_space<vmem>>, vector<1x1x256xf32>
    %450 = vector.shape_cast %449 : vector<1x1x256xf32> to vector<1x256xf32>
    %451 = vector.shape_cast %448 : vector<1x256xf32> to vector<1x1x256xf32>
    tpu.vector_store %arg9[%c1_185, %c17_186, %c0_187], %451 {strides = array<i32>} : memref<2x32x256xf32, #tpu.memory_space<vmem>>, vector<1x1x256xf32>,
    %452 = vector.extract_strided_slice %279 {offsets = [9, 0], sizes = [1, 256], strides = [1, 1]} : vector<16x256xf32> to vector<1x256xf32>
    %c1_188 = arith.constant 1 : index
    %c18_189 = arith.constant 18 : index
    %c0_190 = arith.constant 0 : index
    %453 = vector.load %arg9[%c1_188, %c18_189, %c0_190] : memref<2x32x256xf32, #tpu.memory_space<vmem>>, vector<1x1x256xf32>
    %454 = vector.shape_cast %453 : vector<1x1x256xf32> to vector<1x256xf32>
    %455 = vector.shape_cast %452 : vector<1x256xf32> to vector<1x1x256xf32>
    tpu.vector_store %arg9[%c1_188, %c18_189, %c0_190], %455 {strides = array<i32>} : memref<2x32x256xf32, #tpu.memory_space<vmem>>, vector<1x1x256xf32>,
    %456 = vector.extract_strided_slice %379 {offsets = [9, 0], sizes = [1, 256], strides = [1, 1]} : vector<16x256xf32> to vector<1x256xf32>
    %c1_191 = arith.constant 1 : index
    %c19_192 = arith.constant 19 : index
    %c0_193 = arith.constant 0 : index
    %457 = vector.load %arg9[%c1_191, %c19_192, %c0_193] : memref<2x32x256xf32, #tpu.memory_space<vmem>>, vector<1x1x256xf32>
    %458 = vector.shape_cast %457 : vector<1x1x256xf32> to vector<1x256xf32>
    %459 = vector.shape_cast %456 : vector<1x256xf32> to vector<1x1x256xf32>
    tpu.vector_store %arg9[%c1_191, %c19_192, %c0_193], %459 {strides = array<i32>} : memref<2x32x256xf32, #tpu.memory_space<vmem>>, vector<1x1x256xf32>,
    %460 = vector.extract_strided_slice %279 {offsets = [10, 0], sizes = [1, 256], strides = [1, 1]} : vector<16x256xf32> to vector<1x256xf32>
    %c1_194 = arith.constant 1 : index
    %c20_195 = arith.constant 20 : index
    %c0_196 = arith.constant 0 : index
    %461 = vector.load %arg9[%c1_194, %c20_195, %c0_196] : memref<2x32x256xf32, #tpu.memory_space<vmem>>, vector<1x1x256xf32>
    %462 = vector.shape_cast %461 : vector<1x1x256xf32> to vector<1x256xf32>
    %463 = vector.shape_cast %460 : vector<1x256xf32> to vector<1x1x256xf32>
    tpu.vector_store %arg9[%c1_194, %c20_195, %c0_196], %463 {strides = array<i32>} : memref<2x32x256xf32, #tpu.memory_space<vmem>>, vector<1x1x256xf32>,
    %464 = vector.extract_strided_slice %379 {offsets = [10, 0], sizes = [1, 256], strides = [1, 1]} : vector<16x256xf32> to vector<1x256xf32>
    %c1_197 = arith.constant 1 : index
    %c21_198 = arith.constant 21 : index
    %c0_199 = arith.constant 0 : index
    %465 = vector.load %arg9[%c1_197, %c21_198, %c0_199] : memref<2x32x256xf32, #tpu.memory_space<vmem>>, vector<1x1x256xf32>
    %466 = vector.shape_cast %465 : vector<1x1x256xf32> to vector<1x256xf32>
    %467 = vector.shape_cast %464 : vector<1x256xf32> to vector<1x1x256xf32>
    tpu.vector_store %arg9[%c1_197, %c21_198, %c0_199], %467 {strides = array<i32>} : memref<2x32x256xf32, #tpu.memory_space<vmem>>, vector<1x1x256xf32>,
    %468 = vector.extract_strided_slice %279 {offsets = [11, 0], sizes = [1, 256], strides = [1, 1]} : vector<16x256xf32> to vector<1x256xf32>
    %c1_200 = arith.constant 1 : index
    %c22_201 = arith.constant 22 : index
    %c0_202 = arith.constant 0 : index
    %469 = vector.load %arg9[%c1_200, %c22_201, %c0_202] : memref<2x32x256xf32, #tpu.memory_space<vmem>>, vector<1x1x256xf32>
    %470 = vector.shape_cast %469 : vector<1x1x256xf32> to vector<1x256xf32>
    %471 = vector.shape_cast %468 : vector<1x256xf32> to vector<1x1x256xf32>
    tpu.vector_store %arg9[%c1_200, %c22_201, %c0_202], %471 {strides = array<i32>} : memref<2x32x256xf32, #tpu.memory_space<vmem>>, vector<1x1x256xf32>,
    %472 = vector.extract_strided_slice %379 {offsets = [11, 0], sizes = [1, 256], strides = [1, 1]} : vector<16x256xf32> to vector<1x256xf32>
    %c1_203 = arith.constant 1 : index
    %c23_204 = arith.constant 23 : index
    %c0_205 = arith.constant 0 : index
    %473 = vector.load %arg9[%c1_203, %c23_204, %c0_205] : memref<2x32x256xf32, #tpu.memory_space<vmem>>, vector<1x1x256xf32>
    %474 = vector.shape_cast %473 : vector<1x1x256xf32> to vector<1x256xf32>
    %475 = vector.shape_cast %472 : vector<1x256xf32> to vector<1x1x256xf32>
    tpu.vector_store %arg9[%c1_203, %c23_204, %c0_205], %475 {strides = array<i32>} : memref<2x32x256xf32, #tpu.memory_space<vmem>>, vector<1x1x256xf32>,
    %476 = vector.extract_strided_slice %279 {offsets = [12, 0], sizes = [1, 256], strides = [1, 1]} : vector<16x256xf32> to vector<1x256xf32>
    %c1_206 = arith.constant 1 : index
    %c24_207 = arith.constant 24 : index
    %c0_208 = arith.constant 0 : index
    %477 = vector.load %arg9[%c1_206, %c24_207, %c0_208] : memref<2x32x256xf32, #tpu.memory_space<vmem>>, vector<1x1x256xf32>
    %478 = vector.shape_cast %477 : vector<1x1x256xf32> to vector<1x256xf32>
    %479 = vector.shape_cast %476 : vector<1x256xf32> to vector<1x1x256xf32>
    tpu.vector_store %arg9[%c1_206, %c24_207, %c0_208], %479 {strides = array<i32>} : memref<2x32x256xf32, #tpu.memory_space<vmem>>, vector<1x1x256xf32>,
    %480 = vector.extract_strided_slice %379 {offsets = [12, 0], sizes = [1, 256], strides = [1, 1]} : vector<16x256xf32> to vector<1x256xf32>
    %c1_209 = arith.constant 1 : index
    %c25_210 = arith.constant 25 : index
    %c0_211 = arith.constant 0 : index
    %481 = vector.load %arg9[%c1_209, %c25_210, %c0_211] : memref<2x32x256xf32, #tpu.memory_space<vmem>>, vector<1x1x256xf32>
    %482 = vector.shape_cast %481 : vector<1x1x256xf32> to vector<1x256xf32>
    %483 = vector.shape_cast %480 : vector<1x256xf32> to vector<1x1x256xf32>
    tpu.vector_store %arg9[%c1_209, %c25_210, %c0_211], %483 {strides = array<i32>} : memref<2x32x256xf32, #tpu.memory_space<vmem>>, vector<1x1x256xf32>,
    %484 = vector.extract_strided_slice %279 {offsets = [13, 0], sizes = [1, 256], strides = [1, 1]} : vector<16x256xf32> to vector<1x256xf32>
    %c1_212 = arith.constant 1 : index
    %c26_213 = arith.constant 26 : index
    %c0_214 = arith.constant 0 : index
    %485 = vector.load %arg9[%c1_212, %c26_213, %c0_214] : memref<2x32x256xf32, #tpu.memory_space<vmem>>, vector<1x1x256xf32>
    %486 = vector.shape_cast %485 : vector<1x1x256xf32> to vector<1x256xf32>
    %487 = vector.shape_cast %484 : vector<1x256xf32> to vector<1x1x256xf32>
    tpu.vector_store %arg9[%c1_212, %c26_213, %c0_214], %487 {strides = array<i32>} : memref<2x32x256xf32, #tpu.memory_space<vmem>>, vector<1x1x256xf32>,
    %488 = vector.extract_strided_slice %379 {offsets = [13, 0], sizes = [1, 256], strides = [1, 1]} : vector<16x256xf32> to vector<1x256xf32>
    %c1_215 = arith.constant 1 : index
    %c27_216 = arith.constant 27 : index
    %c0_217 = arith.constant 0 : index
    %489 = vector.load %arg9[%c1_215, %c27_216, %c0_217] : memref<2x32x256xf32, #tpu.memory_space<vmem>>, vector<1x1x256xf32>
    %490 = vector.shape_cast %489 : vector<1x1x256xf32> to vector<1x256xf32>
    %491 = vector.shape_cast %488 : vector<1x256xf32> to vector<1x1x256xf32>
    tpu.vector_store %arg9[%c1_215, %c27_216, %c0_217], %491 {strides = array<i32>} : memref<2x32x256xf32, #tpu.memory_space<vmem>>, vector<1x1x256xf32>,
    %492 = vector.extract_strided_slice %279 {offsets = [14, 0], sizes = [1, 256], strides = [1, 1]} : vector<16x256xf32> to vector<1x256xf32>
    %c1_218 = arith.constant 1 : index
    %c28_219 = arith.constant 28 : index
    %c0_220 = arith.constant 0 : index
    %493 = vector.load %arg9[%c1_218, %c28_219, %c0_220] : memref<2x32x256xf32, #tpu.memory_space<vmem>>, vector<1x1x256xf32>
    %494 = vector.shape_cast %493 : vector<1x1x256xf32> to vector<1x256xf32>
    %495 = vector.shape_cast %492 : vector<1x256xf32> to vector<1x1x256xf32>
    tpu.vector_store %arg9[%c1_218, %c28_219, %c0_220], %495 {strides = array<i32>} : memref<2x32x256xf32, #tpu.memory_space<vmem>>, vector<1x1x256xf32>,
    %496 = vector.extract_strided_slice %379 {offsets = [14, 0], sizes = [1, 256], strides = [1, 1]} : vector<16x256xf32> to vector<1x256xf32>
    %c1_221 = arith.constant 1 : index
    %c29_222 = arith.constant 29 : index
    %c0_223 = arith.constant 0 : index
    %497 = vector.load %arg9[%c1_221, %c29_222, %c0_223] : memref<2x32x256xf32, #tpu.memory_space<vmem>>, vector<1x1x256xf32>
    %498 = vector.shape_cast %497 : vector<1x1x256xf32> to vector<1x256xf32>
    %499 = vector.shape_cast %496 : vector<1x256xf32> to vector<1x1x256xf32>
    tpu.vector_store %arg9[%c1_221, %c29_222, %c0_223], %499 {strides = array<i32>} : memref<2x32x256xf32, #tpu.memory_space<vmem>>, vector<1x1x256xf32>,
    %500 = vector.extract_strided_slice %279 {offsets = [15, 0], sizes = [1, 256], strides = [1, 1]} : vector<16x256xf32> to vector<1x256xf32>
    %c1_224 = arith.constant 1 : index
    %c30_225 = arith.constant 30 : index
    %c0_226 = arith.constant 0 : index
    %501 = vector.load %arg9[%c1_224, %c30_225, %c0_226] : memref<2x32x256xf32, #tpu.memory_space<vmem>>, vector<1x1x256xf32>
    %502 = vector.shape_cast %501 : vector<1x1x256xf32> to vector<1x256xf32>
    %503 = vector.shape_cast %500 : vector<1x256xf32> to vector<1x1x256xf32>
    tpu.vector_store %arg9[%c1_224, %c30_225, %c0_226], %503 {strides = array<i32>} : memref<2x32x256xf32, #tpu.memory_space<vmem>>, vector<1x1x256xf32>,
    %504 = vector.extract_strided_slice %379 {offsets = [15, 0], sizes = [1, 256], strides = [1, 1]} : vector<16x256xf32> to vector<1x256xf32>
    %c1_227 = arith.constant 1 : index
    %c31_228 = arith.constant 31 : index
    %c0_229 = arith.constant 0 : index
    %505 = vector.load %arg9[%c1_227, %c31_228, %c0_229] : memref<2x32x256xf32, #tpu.memory_space<vmem>>, vector<1x1x256xf32>
    %506 = vector.shape_cast %505 : vector<1x1x256xf32> to vector<1x256xf32>
    %507 = vector.shape_cast %504 : vector<1x256xf32> to vector<1x1x256xf32>
    tpu.vector_store %arg9[%c1_227, %c31_228, %c0_229], %507 {strides = array<i32>} : memref<2x32x256xf32, #tpu.memory_space<vmem>>, vector<1x1x256xf32>,
    return
  }
  func.func @transform_0(%arg0: i32) -> (i32, i32, i32) {
    %c0_i32 = arith.constant 0 : i32
    %c0_i32_0 = arith.constant 0 : i32
    %c0_i32_1 = arith.constant 0 : i32
    return %arg0, %c0_i32, %c0_i32_0 : i32, i32, i32
  }
  func.func @transform_1(%arg0: i32) -> (i32, i32, i32) {
    %c0_i32 = arith.constant 0 : i32
    %c0_i32_0 = arith.constant 0 : i32
    %c0_i32_1 = arith.constant 0 : i32
    return %arg0, %c0_i32, %c0_i32_0 : i32, i32, i32
  }
  func.func @transform_2(%arg0: i32) -> (i32, i32) {
    %c0_i32 = arith.constant 0 : i32
    %c0_i32_0 = arith.constant 0 : i32
    %c0_i32_1 = arith.constant 0 : i32
    return %c0_i32, %c0_i32_0 : i32, i32
  }
  func.func @transform_3(%arg0: i32) -> (i32, i32) {
    %c0_i32 = arith.constant 0 : i32
    %c0_i32_0 = arith.constant 0 : i32
    %c0_i32_1 = arith.constant 0 : i32
    return %c0_i32, %c0_i32_0 : i32, i32
  }
  func.func @transform_4(%arg0: i32) -> (i32, i32) {
    %c0_i32 = arith.constant 0 : i32
    %c0_i32_0 = arith.constant 0 : i32
    %c0_i32_1 = arith.constant 0 : i32
    return %c0_i32, %c0_i32_0 : i32, i32
  }
  func.func @transform_5(%arg0: i32) -> (i32, i32) {
    %c0_i32 = arith.constant 0 : i32
    %c0_i32_0 = arith.constant 0 : i32
    %c0_i32_1 = arith.constant 0 : i32
    return %c0_i32, %c0_i32_0 : i32, i32
  }
  func.func @transform_6(%arg0: i32) -> (i32, i32) {
    %c0_i32 = arith.constant 0 : i32
    %c0_i32_0 = arith.constant 0 : i32
    %c0_i32_1 = arith.constant 0 : i32
    return %c0_i32, %c0_i32_0 : i32, i32
  }
  func.func @transform_7(%arg0: i32) -> (i32, i32) {
    %c0_i32 = arith.constant 0 : i32
    %c0_i32_0 = arith.constant 0 : i32
    %c0_i32_1 = arith.constant 0 : i32
    return %c0_i32, %c0_i32_0 : i32, i32
  }
  func.func @transform_8(%arg0: i32) -> (i32, i32, i32) {
    %c0_i32 = arith.constant 0 : i32
    %c0_i32_0 = arith.constant 0 : i32
    %c0_i32_1 = arith.constant 0 : i32
    return %arg0, %c0_i32, %c0_i32_0 : i32, i32, i32
  }
}

</mosaic_0001>

<llo_original>
// kernel: tpu_custom_call.1
$region0: #{tpu_custom_call.1}
  #allocation0 [shape = 'u32[]', space=smem, size = 0x4, offset = 0x4, fixed_abs, tag = 'smem constant byte address 0x4 - core index']
  #allocation1 [shape = 'u32[144,128]{1,0:T(1,128)}', space=vmem, size = 0x12000, scoped, tag = 'internal scratch']
  %s0 = inlined_call_operand.hbm [shape: f32[2,32,256], index: 0, kind: input, shape index: {}]
  %s1 = inlined_call_operand.vmem [shape: f32[2,16,256], index: 1, kind: input, shape index: {}]
  %s2 = inlined_call_operand.hbm [shape: f32[16,9], index: 2, kind: input, shape index: {}]
  %s3 = inlined_call_operand.vmem [shape: f32[16,1], index: 3, kind: input, shape index: {}]
  %s4 = inlined_call_operand.vmem [shape: f32[16,2], index: 4, kind: input, shape index: {}]
  %s5 = inlined_call_operand.vmem [shape: f32[1,2], index: 5, kind: input, shape index: {}]
  %s6 = inlined_call_operand.vmem [shape: f32[16,2], index: 6, kind: input, shape index: {}]
  %s7 = inlined_call_operand.vmem [shape: f32[16,1], index: 7, kind: input, shape index: {}]
  %s8 = inlined_call_operand.hbm [shape: f32[2,32,256], index: 8, kind: output, shape index: {}]
  %s9 = sld [smem:[#allocation0]]
  $region50: #{tpu_custom_call.1} parent=0
    _
  %s11 = ssub.s32 1, %s9
  %s12 = scalar_select 0, %s11, %s9
  $region1: #{tpu_custom_call.1} parent=0
    #allocation2 [shape = 'u8[65536]{0}', space=vmem, size = 0x10000, scoped, tag = 'input window, operand 0, single buffered']
    #allocation3 [shape = 's32[1]{0}', space=sflag, size = 0x4, scoped, tag = 'scoped memory for tpu_custom_call.1']
    #allocation4 [shape = 's32[1]{0}', space=sflag, size = 0x4, scoped, tag = 'scoped memory for tpu_custom_call.1']
    #allocation5 [shape = 'u8[8192]{0}', space=vmem, size = 0x2000, scoped, tag = 'input window, operand 2, single buffered']
    #allocation6 [shape = 's32[1]{0}', space=sflag, size = 0x4, scoped, tag = 'scoped memory for tpu_custom_call.1']
    #allocation7 [shape = 'u8[65536]{0}', space=vmem, size = 0x10000, scoped, tag = 'output window, operand 0, single buffered']
    %13 = vsyncpa [#allocation3], 0
    %14 = vsyncpa [#allocation6], 0
    %15 = vsyncpa [#allocation4], 0
    // Predicated region
    $region2: #{tpu_custom_call.1} parent=1 // pred_check
      _
    $region3: #{tpu_custom_call.1} parent=1 // pred_check_branch
      %17 = sbr.rel (0) target = $region5
    $region4: #{tpu_custom_call.1} parent=1 // pred_region
      %s19 = ssub.s32 2048, 2048
      %20 = vsyncadd [#allocation3], %s19
      %s21 = sshll.u32 [#allocation2], 4
      %s22 = int_to_ptr.vmem [resolvable:$true] %s21
      %27 = dma.hbm_to_vmem [thread:$0]  %s0, 2048, %s22, [#allocation3], 256, 256, 16
    $region5: #{tpu_custom_call.1} parent=1 // pred_fallthru
      _
    // Predicated region
    $region6: #{tpu_custom_call.1} parent=1 // pred_check
      _
    $region7: #{tpu_custom_call.1} parent=1 // pred_check_branch
      %29 = sbr.rel (0) target = $region9
    $region8: #{tpu_custom_call.1} parent=1 // pred_region
      _
    $region9: #{tpu_custom_call.1} parent=1 // pred_fallthru
      _
    // Predicated region
    $region10: #{tpu_custom_call.1} parent=1 // pred_check
      _
    $region11: #{tpu_custom_call.1} parent=1 // pred_check_branch
      %31 = sbr.rel (0) target = $region13
    $region12: #{tpu_custom_call.1} parent=1 // pred_region
      %s33 = ssub.s32 256, 256
      %34 = vsyncadd [#allocation6], %s33
      %s35 = sshll.u32 [#allocation5], 4
      %s36 = int_to_ptr.vmem [resolvable:$true] %s35
      %41 = dma.hbm_to_vmem [thread:$0]  %s2, 256, %s36, [#allocation6], 128, 128, 8
    $region13: #{tpu_custom_call.1} parent=1 // pred_fallthru
      _
    // Predicated region
    $region14: #{tpu_custom_call.1} parent=1 // pred_check
      _
    $region15: #{tpu_custom_call.1} parent=1 // pred_check_branch
      %43 = sbr.rel (0) target = $region17
    $region16: #{tpu_custom_call.1} parent=1 // pred_region
      _
    $region17: #{tpu_custom_call.1} parent=1 // pred_fallthru
      _
    // Predicated region
    $region18: #{tpu_custom_call.1} parent=1 // pred_check
      _
    $region19: #{tpu_custom_call.1} parent=1 // pred_check_branch
      %45 = sbr.rel (0) target = $region21
    $region20: #{tpu_custom_call.1} parent=1 // pred_region
      _
    $region21: #{tpu_custom_call.1} parent=1 // pred_fallthru
      _
    // Predicated region
    $region22: #{tpu_custom_call.1} parent=1 // pred_check
      _
    $region23: #{tpu_custom_call.1} parent=1 // pred_check_branch
      %47 = sbr.rel (0) target = $region25
    $region24: #{tpu_custom_call.1} parent=1 // pred_region
      _
    $region25: #{tpu_custom_call.1} parent=1 // pred_fallthru
      _
    // Predicated region
    $region26: #{tpu_custom_call.1} parent=1 // pred_check
      _
    $region27: #{tpu_custom_call.1} parent=1 // pred_check_branch
      %49 = sbr.rel (0) target = $region29
    $region28: #{tpu_custom_call.1} parent=1 // pred_region
      _
    $region29: #{tpu_custom_call.1} parent=1 // pred_fallthru
      _
    // Predicated region
    $region30: #{tpu_custom_call.1} parent=1 // pred_check
      _
    $region31: #{tpu_custom_call.1} parent=1 // pred_check_branch
      %51 = sbr.rel (0) target = $region33
    $region32: #{tpu_custom_call.1} parent=1 // pred_region
      _
    $region33: #{tpu_custom_call.1} parent=1 // pred_fallthru
      _
    // Predicated region
    $region34: #{tpu_custom_call.1} parent=1 // pred_check
      _
    $region35: #{tpu_custom_call.1} parent=1 // pred_check_branch
      %53 = sbr.rel (0) target = $region37
    $region36: #{tpu_custom_call.1} parent=1 // pred_region
      %54 = dma.done [#allocation3], 2048
    $region37: #{tpu_custom_call.1} parent=1 // pred_fallthru
      _
    // Predicated region
    $region38: #{tpu_custom_call.1} parent=1 // pred_check
      _
    $region39: #{tpu_custom_call.1} parent=1 // pred_check_branch
      %56 = sbr.rel (0) target = $region41
    $region40: #{tpu_custom_call.1} parent=1 // pred_region
      %57 = dma.done [#allocation6], 256
    $region41: #{tpu_custom_call.1} parent=1 // pred_fallthru
      _
    %v58 = vlaneseq
    %v59 = vand.u32 %v58, 127
    %v60 = vadd.s32 %v59, 128
    %v61 = vand.u32 %v59, 15
    %v62 = vand.u32 %v60, 15
    %vm63 = vcmp.ge.s32.totalorder %v59, 16
    %vm64 = vcmp.ge.s32.totalorder %v60, 16
    %vm65 = vcmp.lt.s32.totalorder %v59, 240
    %vm66 = vcmp.lt.s32.totalorder %v60, 240
    %vm67 = vcmp.ge.s32.totalorder %v61, 1
    %vm68 = vcmp.ge.s32.totalorder %v62, 1
    %vm69 = vcmp.lt.s32.totalorder %v61, 15
    %vm70 = vcmp.lt.s32.totalorder %v62, 15
    %v71 = vld [vmem:[#allocation5] sm:$0xff]
    %v72 = vld [vmem:[#allocation5 + $0x8] sm:$0xff]
    %74 = vset.pattern.permute.xlu0 0
    %75 = vperm.xlu0 %74, %v71
    %v76 = vpop.permute.xlu0 %75
    %79 = vset.pattern.permute.xlu0 0
    %80 = vperm.xlu0 %79, %v72
    %v81 = vpop.permute.xlu0 %80
    %83 = vset.pattern.permute.xlu0 1
    %84 = vperm.xlu0 %83, %v71
    %v85 = vpop.permute.xlu0 %84
    %87 = vset.pattern.permute.xlu0 1
    %88 = vperm.xlu0 %87, %v72
    %v89 = vpop.permute.xlu0 %88
    %91 = vset.pattern.permute.xlu0 2
    %92 = vperm.xlu0 %91, %v71
    %v93 = vpop.permute.xlu0 %92
    %95 = vset.pattern.permute.xlu0 2
    %96 = vperm.xlu0 %95, %v72
    %v97 = vpop.permute.xlu0 %96
    %99 = vset.pattern.permute.xlu0 3
    %100 = vperm.xlu0 %99, %v71
    %v101 = vpop.permute.xlu0 %100
    %103 = vset.pattern.permute.xlu0 3
    %104 = vperm.xlu0 %103, %v72
    %v105 = vpop.permute.xlu0 %104
    %107 = vset.pattern.permute.xlu0 4
    %108 = vperm.xlu0 %107, %v71
    %v109 = vpop.permute.xlu0 %108
    %111 = vset.pattern.permute.xlu0 4
    %112 = vperm.xlu0 %111, %v72
    %v113 = vpop.permute.xlu0 %112
    %115 = vset.pattern.permute.xlu0 5
    %116 = vperm.xlu0 %115, %v71
    %v117 = vpop.permute.xlu0 %116
    %119 = vset.pattern.permute.xlu0 5
    %120 = vperm.xlu0 %119, %v72
    %v121 = vpop.permute.xlu0 %120
    %123 = vset.pattern.permute.xlu0 6
    %124 = vperm.xlu0 %123, %v71
    %v125 = vpop.permute.xlu0 %124
    %127 = vset.pattern.permute.xlu0 6
    %128 = vperm.xlu0 %127, %v72
    %v129 = vpop.permute.xlu0 %128
    %131 = vset.pattern.permute.xlu0 7
    %132 = vperm.xlu0 %131, %v71
    %v133 = vpop.permute.xlu0 %132
    %135 = vset.pattern.permute.xlu0 7
    %136 = vperm.xlu0 %135, %v72
    %v137 = vpop.permute.xlu0 %136
    %139 = vset.pattern.permute.xlu0 8
    %140 = vperm.xlu0 %139, %v71
    %v141 = vpop.permute.xlu0 %140
    %143 = vset.pattern.permute.xlu0 8
    %144 = vperm.xlu0 %143, %v72
    %v145 = vpop.permute.xlu0 %144
    %v147 = vld [vmem:[%s3] sm:$0xff]
    %v148 = vld [vmem:[%s3 + $0x8] sm:$0xff]
    %150 = vset.pattern.permute.xlu0 0
    %151 = vperm.xlu0 %150, %v147
    %v152 = vpop.permute.xlu0 %151
    %155 = vset.pattern.permute.xlu0 0
    %156 = vperm.xlu0 %155, %v148
    %v157 = vpop.permute.xlu0 %156
    %v159 = vld [vmem:[%s4] sm:$0xff]
    %v160 = vld [vmem:[%s4 + $0x8] sm:$0xff]
    %v161 = vld [vmem:[%s5] sm:$0x1]
    %v162 = vld [vmem:[%s6] sm:$0xff]
    %v163 = vld [vmem:[%s6 + $0x8] sm:$0xff]
    %v164 = vld [vmem:[%s7] sm:$0xff]
    %v165 = vld [vmem:[%s7 + $0x8] sm:$0xff]
    %v166 = vld [vmem:[#allocation2] sm:$0xff]
    %v167 = vld [vmem:[#allocation2 + $0x8] sm:$0xff]
    %v168 = vld [vmem:[#allocation2 + $0x10] sm:$0xff]
    %v169 = vld [vmem:[#allocation2 + $0x18] sm:$0xff]
    %v170 = vld [vmem:[#allocation2 + $0x20] sm:$0xff]
    %v171 = vld [vmem:[#allocation2 + $0x28] sm:$0xff]
    %v172 = vld [vmem:[#allocation2 + $0x30] sm:$0xff]
    %v173 = vld [vmem:[#allocation2 + $0x38] sm:$0xff]
    %v174 = vld [vmem:[%s1] sm:$0xff]
    %v175 = vld [vmem:[%s1 + $0x8] sm:$0xff]
    %v176 = vld [vmem:[%s1 + $0x10] sm:$0xff]
    %v177 = vld [vmem:[%s1 + $0x18] sm:$0xff]
    %v178 = vmul.f32 %v170, %v174
    %v179 = vmul.f32 %v171, %v175
    %v180 = vmul.f32 %v172, %v176
    %v181 = vmul.f32 %v173, %v177
    %182 = vrot.lane.b32.xlu0 %v178, 17
    %v183 = vpop.permute.xlu0 %182
    %184 = vrot.lane.b32.xlu0 %v180, 17
    %v185 = vpop.permute.xlu0 %184
    %186 = vrot.lane.b32.xlu0 %v179, 17
    %v187 = vpop.permute.xlu0 %186
    %188 = vrot.lane.b32.xlu0 %v181, 17
    %v189 = vpop.permute.xlu0 %188
    %vm190 = vcmp.lt.s32.totalorder %v59, 17
    %v191 = vsel %vm190, %v183, %v187
    %v192 = vsel %vm190, %v185, %v189
    %v193 = vsel %vm190, %v187, %v183
    %v194 = vsel %vm190, %v189, %v185
    %vm195 = vmand %vm63, %vm67
    %vm196 = vmand %vm64, %vm68
    %v197 = vsel %vm195, 1, 0
    %v198 = vsel %vm196, 1, 0
    %vm199 = vcmp.eq.s32.totalorder %v197, 1
    %vm200 = vcmp.eq.s32.totalorder %v198, 1
    %v201 = vsel %vm199, %v193, 0.0
    %v202 = vsel %vm200, %v191, 0.0
    %v203 = vsel %vm199, %v194, 0.0
    %v204 = vsel %vm200, %v192, 0.0
    %v205 = vmul.f32 %v201, %v76
    %v206 = vmul.f32 %v202, %v76
    %v207 = vmul.f32 %v203, %v81
    %v208 = vmul.f32 %v204, %v81
    %v209 = vadd.f32 %v205, 0.0
    %v210 = vadd.f32 %v206, 0.0
    %v211 = vadd.f32 %v207, 0.0
    %v212 = vadd.f32 %v208, 0.0
    %213 = vrot.lane.b32.xlu0 %v178, 16
    %v214 = vpop.permute.xlu0 %213
    %215 = vrot.lane.b32.xlu0 %v180, 16
    %v216 = vpop.permute.xlu0 %215
    %217 = vrot.lane.b32.xlu0 %v179, 16
    %v218 = vpop.permute.xlu0 %217
    %219 = vrot.lane.b32.xlu0 %v181, 16
    %v220 = vpop.permute.xlu0 %219
    %vm221 = vcmp.lt.s32.totalorder %v59, 16
    %v222 = vsel %vm221, %v214, %v218
    %v223 = vsel %vm221, %v216, %v220
    %v224 = vsel %vm221, %v218, %v214
    %v225 = vsel %vm221, %v220, %v216
    %v226 = vsel %vm63, 1, 0
    %v227 = vsel %vm64, 1, 0
    %vm228 = vcmp.eq.s32.totalorder %v226, 1
    %vm229 = vcmp.eq.s32.totalorder %v227, 1
    %v230 = vsel %vm228, %v224, 0.0
    %v231 = vsel %vm229, %v222, 0.0
    %v232 = vsel %vm228, %v225, 0.0
    %v233 = vsel %vm229, %v223, 0.0
    %v234 = vmul.f32 %v230, %v85
    %v235 = vmul.f32 %v231, %v85
    %v236 = vmul.f32 %v232, %v89
    %v237 = vmul.f32 %v233, %v89
    %v238 = vadd.f32 %v209, %v234
    %v239 = vadd.f32 %v210, %v235
    %v240 = vadd.f32 %v211, %v236
    %v241 = vadd.f32 %v212, %v237
    %242 = vrot.lane.b32.xlu0 %v178, 15
    %v243 = vpop.permute.xlu0 %242
    %244 = vrot.lane.b32.xlu0 %v180, 15
    %v245 = vpop.permute.xlu0 %244
    %246 = vrot.lane.b32.xlu0 %v179, 15
    %v247 = vpop.permute.xlu0 %246
    %248 = vrot.lane.b32.xlu0 %v181, 15
    %v249 = vpop.permute.xlu0 %248
    %vm250 = vcmp.lt.s32.totalorder %v59, 15
    %v251 = vsel %vm250, %v243, %v247
    %v252 = vsel %vm250, %v245, %v249
    %v253 = vsel %vm250, %v247, %v243
    %v254 = vsel %vm250, %v249, %v245
    %vm255 = vmand %vm63, %vm69
    %vm256 = vmand %vm64, %vm70
    %v257 = vsel %vm255, 1, 0
    %v258 = vsel %vm256, 1, 0
    %vm259 = vcmp.eq.s32.totalorder %v257, 1
    %vm260 = vcmp.eq.s32.totalorder %v258, 1
    %v261 = vsel %vm259, %v253, 0.0
    %v262 = vsel %vm260, %v251, 0.0
    %v263 = vsel %vm259, %v254, 0.0
    %v264 = vsel %vm260, %v252, 0.0
    %v265 = vmul.f32 %v261, %v93
    %v266 = vmul.f32 %v262, %v93
    %v267 = vmul.f32 %v263, %v97
    %v268 = vmul.f32 %v264, %v97
    %v269 = vadd.f32 %v238, %v265
    %v270 = vadd.f32 %v239, %v266
    %v271 = vadd.f32 %v240, %v267
    %v272 = vadd.f32 %v241, %v268
    %273 = vrot.lane.b32.xlu0 %v178, 1
    %v274 = vpop.permute.xlu0 %273
    %275 = vrot.lane.b32.xlu0 %v180, 1
    %v276 = vpop.permute.xlu0 %275
    %277 = vrot.lane.b32.xlu0 %v179, 1
    %v278 = vpop.permute.xlu0 %277
    %279 = vrot.lane.b32.xlu0 %v181, 1
    %v280 = vpop.permute.xlu0 %279
    %vm281 = vcmp.lt.s32.totalorder %v59, 1
    %v282 = vsel %vm281, %v274, %v278
    %v283 = vsel %vm281, %v276, %v280
    %v284 = vsel %vm281, %v278, %v274
    %v285 = vsel %vm281, %v280, %v276
    %v286 = vsel %vm67, 1, 0
    %v287 = vsel %vm68, 1, 0
    %vm288 = vcmp.eq.s32.totalorder %v286, 1
    %vm289 = vcmp.eq.s32.totalorder %v287, 1
    %v290 = vsel %vm288, %v284, 0.0
    %v291 = vsel %vm289, %v282, 0.0
    %v292 = vsel %vm288, %v285, 0.0
    %v293 = vsel %vm289, %v283, 0.0
    %v294 = vmul.f32 %v290, %v101
    %v295 = vmul.f32 %v291, %v101
    %v296 = vmul.f32 %v292, %v105
    %v297 = vmul.f32 %v293, %v105
    %v298 = vadd.f32 %v269, %v294
    %v299 = vadd.f32 %v270, %v295
    %v300 = vadd.f32 %v271, %v296
    %v301 = vadd.f32 %v272, %v297
    %v302 = vmul.f32 %v178, %v109
    %v303 = vmul.f32 %v179, %v109
    %v304 = vmul.f32 %v180, %v113
    %v305 = vmul.f32 %v181, %v113
    %v306 = vadd.f32 %v298, %v302
    %v307 = vadd.f32 %v299, %v303
    %v308 = vadd.f32 %v300, %v304
    %v309 = vadd.f32 %v301, %v305
    %310 = vrot.lane.b32.xlu0 %v178, 127
    %v311 = vpop.permute.xlu0 %310
    %312 = vrot.lane.b32.xlu0 %v180, 127
    %v313 = vpop.permute.xlu0 %312
    %314 = vrot.lane.b32.xlu0 %v179, 127
    %v315 = vpop.permute.xlu0 %314
    %316 = vrot.lane.b32.xlu0 %v181, 127
    %v317 = vpop.permute.xlu0 %316
    %vm318 = vcmp.lt.s32.totalorder %v59, 127
    %v319 = vsel %vm318, %v311, %v315
    %v320 = vsel %vm318, %v313, %v317
    %v321 = vsel %vm318, %v315, %v311
    %v322 = vsel %vm318, %v317, %v313
    %v323 = vsel %vm69, 1, 0
    %v324 = vsel %vm70, 1, 0
    %vm325 = vcmp.eq.s32.totalorder %v323, 1
    %vm326 = vcmp.eq.s32.totalorder %v324, 1
    %v327 = vsel %vm325, %v319, 0.0
    %v328 = vsel %vm326, %v321, 0.0
    %v329 = vsel %vm325, %v320, 0.0
    %v330 = vsel %vm326, %v322, 0.0
    %v331 = vmul.f32 %v327, %v117
    %v332 = vmul.f32 %v328, %v117
    %v333 = vmul.f32 %v329, %v121
    %v334 = vmul.f32 %v330, %v121
    %v335 = vadd.f32 %v306, %v331
    %v336 = vadd.f32 %v307, %v332
    %v337 = vadd.f32 %v308, %v333
    %v338 = vadd.f32 %v309, %v334
    %339 = vrot.lane.b32.xlu0 %v178, 113
    %v340 = vpop.permute.xlu0 %339
    %341 = vrot.lane.b32.xlu0 %v180, 113
    %v342 = vpop.permute.xlu0 %341
    %343 = vrot.lane.b32.xlu0 %v179, 113
    %v344 = vpop.permute.xlu0 %343
    %345 = vrot.lane.b32.xlu0 %v181, 113
    %v346 = vpop.permute.xlu0 %345
    %vm347 = vcmp.lt.s32.totalorder %v59, 113
    %v348 = vsel %vm347, %v340, %v344
    %v349 = vsel %vm347, %v342, %v346
    %v350 = vsel %vm347, %v344, %v340
    %v351 = vsel %vm347, %v346, %v342
    %vm352 = vmand %vm65, %vm67
    %vm353 = vmand %vm66, %vm68
    %v354 = vsel %vm352, 1, 0
    %v355 = vsel %vm353, 1, 0
    %vm356 = vcmp.eq.s32.totalorder %v354, 1
    %vm357 = vcmp.eq.s32.totalorder %v355, 1
    %v358 = vsel %vm356, %v348, 0.0
    %v359 = vsel %vm357, %v350, 0.0
    %v360 = vsel %vm356, %v349, 0.0
    %v361 = vsel %vm357, %v351, 0.0
    %v362 = vmul.f32 %v358, %v125
    %v363 = vmul.f32 %v359, %v125
    %v364 = vmul.f32 %v360, %v129
    %v365 = vmul.f32 %v361, %v129
    %v366 = vadd.f32 %v335, %v362
    %v367 = vadd.f32 %v336, %v363
    %v368 = vadd.f32 %v337, %v364
    %v369 = vadd.f32 %v338, %v365
    %370 = vrot.lane.b32.xlu0 %v178, 112
    %v371 = vpop.permute.xlu0 %370
    %372 = vrot.lane.b32.xlu0 %v180, 112
    %v373 = vpop.permute.xlu0 %372
    %374 = vrot.lane.b32.xlu0 %v179, 112
    %v375 = vpop.permute.xlu0 %374
    %376 = vrot.lane.b32.xlu0 %v181, 112
    %v377 = vpop.permute.xlu0 %376
    %vm378 = vcmp.lt.s32.totalorder %v59, 112
    %v379 = vsel %vm378, %v371, %v375
    %v380 = vsel %vm378, %v373, %v377
    %v381 = vsel %vm378, %v375, %v371
    %v382 = vsel %vm378, %v377, %v373
    %v383 = vsel %vm65, 1, 0
    %v384 = vsel %vm66, 1, 0
    %vm385 = vcmp.eq.s32.totalorder %v383, 1
    %vm386 = vcmp.eq.s32.totalorder %v384, 1
    %v387 = vsel %vm385, %v379, 0.0
    %v388 = vsel %vm386, %v381, 0.0
    %v389 = vsel %vm385, %v380, 0.0
    %v390 = vsel %vm386, %v382, 0.0
    %v391 = vmul.f32 %v387, %v133
    %v392 = vmul.f32 %v388, %v133
    %v393 = vmul.f32 %v389, %v137
    %v394 = vmul.f32 %v390, %v137
    %v395 = vadd.f32 %v366, %v391
    %v396 = vadd.f32 %v367, %v392
    %v397 = vadd.f32 %v368, %v393
    %v398 = vadd.f32 %v369, %v394
    %399 = vrot.lane.b32.xlu0 %v178, 111
    %v400 = vpop.permute.xlu0 %399
    %401 = vrot.lane.b32.xlu0 %v180, 111
    %v402 = vpop.permute.xlu0 %401
    %403 = vrot.lane.b32.xlu0 %v179, 111
    %v404 = vpop.permute.xlu0 %403
    %405 = vrot.lane.b32.xlu0 %v181, 111
    %v406 = vpop.permute.xlu0 %405
    %vm407 = vcmp.lt.s32.totalorder %v59, 111
    %v408 = vsel %vm407, %v400, %v404
    %v409 = vsel %vm407, %v402, %v406
    %v410 = vsel %vm407, %v404, %v400
    %v411 = vsel %vm407, %v406, %v402
    %vm412 = vmand %vm65, %vm69
    %vm413 = vmand %vm66, %vm70
    %v414 = vsel %vm412, 1, 0
    %v415 = vsel %vm413, 1, 0
    %vm416 = vcmp.eq.s32.totalorder %v414, 1
    %vm417 = vcmp.eq.s32.totalorder %v415, 1
    %v418 = vsel %vm416, %v408, 0.0
    %v419 = vsel %vm417, %v410, 0.0
    %v420 = vsel %vm416, %v409, 0.0
    %v421 = vsel %vm417, %v411, 0.0
    %v422 = vmul.f32 %v418, %v141
    %v423 = vmul.f32 %v419, %v141
    %v424 = vmul.f32 %v420, %v145
    %v425 = vmul.f32 %v421, %v145
    %v426 = vadd.f32 %v395, %v422
    %v427 = vadd.f32 %v396, %v423
    %v428 = vadd.f32 %v397, %v424
    %v429 = vadd.f32 %v398, %v425
    %v430 = vadd.f32 %v426, %v152
    %v431 = vadd.f32 %v427, %v152
    %v432 = vadd.f32 %v428, %v157
    %v433 = vadd.f32 %v429, %v157
    %v434 = vmax.f32 %v430, 0.0
    %v435 = vmax.f32 %v431, 0.0
    %v436 = vmax.f32 %v432, 0.0
    %v437 = vmax.f32 %v433, 0.0
    %v438 = vadd.f32 %v434, %v435
    %439 = vadd.xlane.f32.xlu0 %v438
    %v440 = vpop.xlane.xlu0 %439
    %v441 = vadd.f32 %v436, %v437
    %442 = vadd.xlane.f32.xlu0 %v441
    %v443 = vpop.xlane.xlu0 %442
    %v444 = vmul.f32 %v440, 0.00390625
    %v445 = vmul.f32 %v443, 0.00390625
    %v446 = vmul.f32 %v444, %v159
    %v447 = vmul.f32 %v445, %v160
    %vm448 = vcmask 15360
    %v449 = vsel %vm448, %v446, 0.0
    %v450 = vsel %vm448, %v447, 0.0
    %v451 = vadd.f32 %v449, %v450
    %v452 = vrot.slane %v451, 4
    %v453 = vadd.f32 %v451, %v452
    %v454 = vrot.slane %v453, 2
    %v455 = vadd.f32 %v453, %v454
    %v456 = vrot.slane %v455, 1
    %v457 = vadd.f32 %v455, %v456
    %v458 = vadd.f32 %v457, %v161
    %v459 = vmax.f32 %v458, 0.0
    %v460 = vlaneseq
    %v461 = vshrl.u32 %v460, 7
    %v462 = vsub.s32 0, %v461
    %v463 = vrot.slane %v459, %v462
    %v464 = vmul.f32 %v463, %v162
    %v465 = vmul.f32 %v463, %v163
    %v466 = vadd.f32 %v164, %v464
    %v467 = vadd.f32 %v165, %v465
    %470 = vrot.lane.b32.xlu0 %v464, 127
    %v471 = vpop.permute.xlu0 %470
    %472 = vrot.lane.b32.xlu0 %v465, 127
    %v473 = vpop.permute.xlu0 %472
    %v476 = vadd.f32 %v466, %v471
    %v477 = vadd.f32 %v467, %v473
    %v478 = vsub.f32 0.0, %v476
    %v479 = vsub.f32 0.0, %v477
    %v480 = vmul.f32 %v478, 1.442695
    %v481 = vpow.pop %v480
    %v482 = vmul.f32 %v479, 1.442695
    %v483 = vpow.pop %v482
    %v484 = vadd.f32 %v481, 1.0
    %v485 = vadd.f32 %v483, 1.0
    %v486 = vrcp.pop %v484
    %v487 = vmul.f32 1.0, %v486
    %v488 = vrcp.pop %v485
    %v489 = vmul.f32 1.0, %v488
    %491 = vset.pattern.permute.xlu0 0
    %492 = vperm.xlu0 %491, %v487
    %v493 = vpop.permute.xlu0 %492
    %496 = vset.pattern.permute.xlu0 0
    %497 = vperm.xlu0 %496, %v489
    %v498 = vpop.permute.xlu0 %497
    %v500 = vmul.f32 %v434, %v493
    %v501 = vmul.f32 %v435, %v493
    %v502 = vmul.f32 %v436, %v498
    %v503 = vmul.f32 %v437, %v498
    %v506 = vcombine.low %v166, %v167
    %v508 = vunpack.c.l.s4 1966171168
    %v509 = vunpack.c.0.s8 %v508
    %v510 = vlaneseq
    %v511 = vshrl.u32 %v510, 7
    %v512 = vsub.s32 %v509, %v511
    %v513 = vrot.slane %v506, %v512
    %v515 = vunpack.c.l.s4 1966171168
    %v516 = vunpack.c.0.s8 %v515
    %v517 = vlaneseq
    %v518 = vshrl.u32 %v517, 7
    %v519 = vsub.s32 %v516, %v518
    %v520 = vrot.slane %v513, %v519
    %v522 = vlaneseq
    %vm523 = vcmp.ge.s32.totalorder %v522, 0
    %vm524 = vcmp.lt.s32.totalorder %v522, 256
    %vm525 = vmand %vm523, %vm524
    %526 = vst.msk [vmem:[#allocation7] ss:$8 sm:$0x3] %vm525, %v520
    %527 = vst.msk [vmem:[#allocation7] ss:$8 sm:$0x0] %vm525, %v520
    %v530 = vcombine.low %v500, %v501
    %v532 = vunpack.c.l.s4 1966171168
    %v533 = vunpack.c.0.s8 %v532
    %v534 = vlaneseq
    %v535 = vshrl.u32 %v534, 7
    %v536 = vsub.s32 %v533, %v535
    %v537 = vrot.slane %v530, %v536
    %v539 = vunpack.c.l.s4 1966171168
    %v540 = vunpack.c.0.s8 %v539
    %v541 = vlaneseq
    %v542 = vshrl.u32 %v541, 7
    %v543 = vsub.s32 %v540, %v542
    %v544 = vrot.slane %v537, %v543
    %s546 = scalar_lea.vmem [#allocation7], 1
    %547 = vst.msk [vmem:[%s546] ss:$8 sm:$0x3] %vm525, %v544
    %548 = vst.msk [vmem:[%s546] ss:$8 sm:$0x0] %vm525, %v544
    %v549 = vcombine.high %v513, %v513
    %v551 = vunpack.c.l.s4 1966171168
    %v552 = vunpack.c.0.s8 %v551
    %v553 = vlaneseq
    %v554 = vshrl.u32 %v553, 7
    %v555 = vsub.s32 %v552, %v554
    %v556 = vrot.slane %v549, %v555
    %s558 = scalar_lea.vmem [#allocation7], 2
    %559 = vst.msk [vmem:[%s558] ss:$8 sm:$0x3] %vm525, %v556
    %560 = vst.msk [vmem:[%s558] ss:$8 sm:$0x0] %vm525, %v556
    %v561 = vcombine.high %v537, %v537
    %v563 = vunpack.c.l.s4 1966171168
    %v564 = vunpack.c.0.s8 %v563
    %v565 = vlaneseq
    %v566 = vshrl.u32 %v565, 7
    %v567 = vsub.s32 %v564, %v566
    %v568 = vrot.slane %v561, %v567
    %s570 = scalar_lea.vmem [#allocation7], 3
    %571 = vst.msk [vmem:[%s570] ss:$8 sm:$0x3] %vm525, %v568
    %572 = vst.msk [vmem:[%s570] ss:$8 sm:$0x0] %vm525, %v568
    %v573 = vcombine.high %v520, %v520
    %s575 = scalar_lea.vmem [#allocation7], 4
    %576 = vst.msk [vmem:[%s575] ss:$8 sm:$0x3] %vm525, %v573
    %577 = vst.msk [vmem:[%s575] ss:$8 sm:$0x0] %vm525, %v573
    %v578 = vcombine.high %v544, %v544
    %s580 = scalar_lea.vmem [#allocation7], 5
    %581 = vst.msk [vmem:[%s580] ss:$8 sm:$0x3] %vm525, %v578
    %582 = vst.msk [vmem:[%s580] ss:$8 sm:$0x0] %vm525, %v578
    %v583 = vcombine.high %v556, %v556
    %s585 = scalar_lea.vmem [#allocation7], 6
    %586 = vst.msk [vmem:[%s585] ss:$8 sm:$0x3] %vm525, %v583
    %587 = vst.msk [vmem:[%s585] ss:$8 sm:$0x0] %vm525, %v583
    %v588 = vcombine.high %v568, %v568
    %s590 = scalar_lea.vmem [#allocation7], 7
    %591 = vst.msk [vmem:[%s590] ss:$8 sm:$0x3] %vm525, %v588
    %592 = vst.msk [vmem:[%s590] ss:$8 sm:$0x0] %vm525, %v588
    %v593 = vcombine.high %v166, %v167
    %v595 = vunpack.c.l.s4 1966171168
    %v596 = vunpack.c.0.s8 %v595
    %v597 = vlaneseq
    %v598 = vshrl.u32 %v597, 7
    %v599 = vsub.s32 %v596, %v598
    %v600 = vrot.slane %v593, %v599
    %v602 = vunpack.c.l.s4 1966171168
    %v603 = vunpack.c.0.s8 %v602
    %v604 = vlaneseq
    %v605 = vshrl.u32 %v604, 7
    %v606 = vsub.s32 %v603, %v605
    %v607 = vrot.slane %v600, %v606
    %s609 = scalar_lea.vmem [#allocation7], 16
    %610 = vst.msk [vmem:[%s609] ss:$8 sm:$0x3] %vm525, %v607
    %611 = vst.msk [vmem:[%s609] ss:$8 sm:$0x0] %vm525, %v607
    %v612 = vcombine.high %v500, %v501
    %v614 = vunpack.c.l.s4 1966171168
    %v615 = vunpack.c.0.s8 %v614
    %v616 = vlaneseq
    %v617 = vshrl.u32 %v616, 7
    %v618 = vsub.s32 %v615, %v617
    %v619 = vrot.slane %v612, %v618
    %v621 = vunpack.c.l.s4 1966171168
    %v622 = vunpack.c.0.s8 %v621
    %v623 = vlaneseq
    %v624 = vshrl.u32 %v623, 7
    %v625 = vsub.s32 %v622, %v624
    %v626 = vrot.slane %v619, %v625
    %s628 = scalar_lea.vmem [#allocation7], 17
    %629 = vst.msk [vmem:[%s628] ss:$8 sm:$0x3] %vm525, %v626
    %630 = vst.msk [vmem:[%s628] ss:$8 sm:$0x0] %vm525, %v626
    %v631 = vcombine.high %v600, %v600
    %v633 = vunpack.c.l.s4 1966171168
    %v634 = vunpack.c.0.s8 %v633
    %v635 = vlaneseq
    %v636 = vshrl.u32 %v635, 7
    %v637 = vsub.s32 %v634, %v636
    %v638 = vrot.slane %v631, %v637
    %s640 = scalar_lea.vmem [#allocation7], 18
    %641 = vst.msk [vmem:[%s640] ss:$8 sm:$0x3] %vm525, %v638
    %642 = vst.msk [vmem:[%s640] ss:$8 sm:$0x0] %vm525, %v638
    %v643 = vcombine.high %v619, %v619
    %v645 = vunpack.c.l.s4 1966171168
    %v646 = vunpack.c.0.s8 %v645
    %v647 = vlaneseq
    %v648 = vshrl.u32 %v647, 7
    %v649 = vsub.s32 %v646, %v648
    %v650 = vrot.slane %v643, %v649
    %s652 = scalar_lea.vmem [#allocation7], 19
    %653 = vst.msk [vmem:[%s652] ss:$8 sm:$0x3] %vm525, %v650
    %654 = vst.msk [vmem:[%s652] ss:$8 sm:$0x0] %vm525, %v650
    %v655 = vcombine.high %v607, %v607
    %s657 = scalar_lea.vmem [#allocation7], 20
    %658 = vst.msk [vmem:[%s657] ss:$8 sm:$0x3] %vm525, %v655
    %659 = vst.msk [vmem:[%s657] ss:$8 sm:$0x0] %vm525, %v655
    %v660 = vcombine.high %v626, %v626
    %s662 = scalar_lea.vmem [#allocation7], 21
    %663 = vst.msk [vmem:[%s662] ss:$8 sm:$0x3] %vm525, %v660
    %664 = vst.msk [vmem:[%s662] ss:$8 sm:$0x0] %vm525, %v660
    %v665 = vcombine.high %v638, %v638
    %s667 = scalar_lea.vmem [#allocation7], 22
    %668 = vst.msk [vmem:[%s667] ss:$8 sm:$0x3] %vm525, %v665
    %669 = vst.msk [vmem:[%s667] ss:$8 sm:$0x0] %vm525, %v665
    %v670 = vcombine.high %v650, %v650
    %s672 = scalar_lea.vmem [#allocation7], 23
    %673 = vst.msk [vmem:[%s672] ss:$8 sm:$0x3] %vm525, %v670
    %674 = vst.msk [vmem:[%s672] ss:$8 sm:$0x0] %vm525, %v670
    %v677 = vcombine.low %v168, %v169
    %v679 = vunpack.c.l.s4 1966171168
    %v680 = vunpack.c.0.s8 %v679
    %v681 = vlaneseq
    %v682 = vshrl.u32 %v681, 7
    %v683 = vsub.s32 %v680, %v682
    %v684 = vrot.slane %v677, %v683
    %v686 = vunpack.c.l.s4 1966171168
    %v687 = vunpack.c.0.s8 %v686
    %v688 = vlaneseq
    %v689 = vshrl.u32 %v688, 7
    %v690 = vsub.s32 %v687, %v689
    %v691 = vrot.slane %v684, %v690
    %s693 = scalar_lea.vmem [#allocation7], 32
    %694 = vst.msk [vmem:[%s693] ss:$8 sm:$0x3] %vm525, %v691
    %695 = vst.msk [vmem:[%s693] ss:$8 sm:$0x0] %vm525, %v691
    %v698 = vcombine.low %v502, %v503
    %v700 = vunpack.c.l.s4 1966171168
    %v701 = vunpack.c.0.s8 %v700
    %v702 = vlaneseq
    %v703 = vshrl.u32 %v702, 7
    %v704 = vsub.s32 %v701, %v703
    %v705 = vrot.slane %v698, %v704
    %v707 = vunpack.c.l.s4 1966171168
    %v708 = vunpack.c.0.s8 %v707
    %v709 = vlaneseq
    %v710 = vshrl.u32 %v709, 7
    %v711 = vsub.s32 %v708, %v710
    %v712 = vrot.slane %v705, %v711
    %s714 = scalar_lea.vmem [#allocation7], 33
    %715 = vst.msk [vmem:[%s714] ss:$8 sm:$0x3] %vm525, %v712
    %716 = vst.msk [vmem:[%s714] ss:$8 sm:$0x0] %vm525, %v712
    %v717 = vcombine.high %v684, %v684
    %v719 = vunpack.c.l.s4 1966171168
    %v720 = vunpack.c.0.s8 %v719
    %v721 = vlaneseq
    %v722 = vshrl.u32 %v721, 7
    %v723 = vsub.s32 %v720, %v722
    %v724 = vrot.slane %v717, %v723
    %s726 = scalar_lea.vmem [#allocation7], 34
    %727 = vst.msk [vmem:[%s726] ss:$8 sm:$0x3] %vm525, %v724
    %728 = vst.msk [vmem:[%s726] ss:$8 sm:$0x0] %vm525, %v724
    %v729 = vcombine.high %v705, %v705
    %v731 = vunpack.c.l.s4 1966171168
    %v732 = vunpack.c.0.s8 %v731
    %v733 = vlaneseq
    %v734 = vshrl.u32 %v733, 7
    %v735 = vsub.s32 %v732, %v734
    %v736 = vrot.slane %v729, %v735
    %s738 = scalar_lea.vmem [#allocation7], 35
    %739 = vst.msk [vmem:[%s738] ss:$8 sm:$0x3] %vm525, %v736
    %740 = vst.msk [vmem:[%s738] ss:$8 sm:$0x0] %vm525, %v736
    %v741 = vcombine.high %v691, %v691
    %s743 = scalar_lea.vmem [#allocation7], 36
    %744 = vst.msk [vmem:[%s743] ss:$8 sm:$0x3] %vm525, %v741
    %745 = vst.msk [vmem:[%s743] ss:$8 sm:$0x0] %vm525, %v741
    %v746 = vcombine.high %v712, %v712
    %s748 = scalar_lea.vmem [#allocation7], 37
    %749 = vst.msk [vmem:[%s748] ss:$8 sm:$0x3] %vm525, %v746
    %750 = vst.msk [vmem:[%s748] ss:$8 sm:$0x0] %vm525, %v746
    %v751 = vcombine.high %v724, %v724
    %s753 = scalar_lea.vmem [#allocation7], 38
    %754 = vst.msk [vmem:[%s753] ss:$8 sm:$0x3] %vm525, %v751
    %755 = vst.msk [vmem:[%s753] ss:$8 sm:$0x0] %vm525, %v751
    %v756 = vcombine.high %v736, %v736
    %s758 = scalar_lea.vmem [#allocation7], 39
    %759 = vst.msk [vmem:[%s758] ss:$8 sm:$0x3] %vm525, %v756
    %760 = vst.msk [vmem:[%s758] ss:$8 sm:$0x0] %vm525, %v756
    %v761 = vcombine.high %v168, %v169
    %v763 = vunpack.c.l.s4 1966171168
    %v764 = vunpack.c.0.s8 %v763
    %v765 = vlaneseq
    %v766 = vshrl.u32 %v765, 7
    %v767 = vsub.s32 %v764, %v766
    %v768 = vrot.slane %v761, %v767
    %v770 = vunpack.c.l.s4 1966171168
    %v771 = vunpack.c.0.s8 %v770
    %v772 = vlaneseq
    %v773 = vshrl.u32 %v772, 7
    %v774 = vsub.s32 %v771, %v773
    %v775 = vrot.slane %v768, %v774
    %s777 = scalar_lea.vmem [#allocation7], 48
    %778 = vst.msk [vmem:[%s777] ss:$8 sm:$0x3] %vm525, %v775
    %779 = vst.msk [vmem:[%s777] ss:$8 sm:$0x0] %vm525, %v775
    %v780 = vcombine.high %v502, %v503
    %v782 = vunpack.c.l.s4 1966171168
    %v783 = vunpack.c.0.s8 %v782
    %v784 = vlaneseq
    %v785 = vshrl.u32 %v784, 7
    %v786 = vsub.s32 %v783, %v785
    %v787 = vrot.slane %v780, %v786
    %v789 = vunpack.c.l.s4 1966171168
    %v790 = vunpack.c.0.s8 %v789
    %v791 = vlaneseq
    %v792 = vshrl.u32 %v791, 7
    %v793 = vsub.s32 %v790, %v792
    %v794 = vrot.slane %v787, %v793
    %s796 = scalar_lea.vmem [#allocation7], 49
    %797 = vst.msk [vmem:[%s796] ss:$8 sm:$0x3] %vm525, %v794
    %798 = vst.msk [vmem:[%s796] ss:$8 sm:$0x0] %vm525, %v794
    %v799 = vcombine.high %v768, %v768
    %v801 = vunpack.c.l.s4 1966171168
    %v802 = vunpack.c.0.s8 %v801
    %v803 = vlaneseq
    %v804 = vshrl.u32 %v803, 7
    %v805 = vsub.s32 %v802, %v804
    %v806 = vrot.slane %v799, %v805
    %s808 = scalar_lea.vmem [#allocation7], 50
    %809 = vst.msk [vmem:[%s808] ss:$8 sm:$0x3] %vm525, %v806
    %810 = vst.msk [vmem:[%s808] ss:$8 sm:$0x0] %vm525, %v806
    %v811 = vcombine.high %v787, %v787
    %v813 = vunpack.c.l.s4 1966171168
    %v814 = vunpack.c.0.s8 %v813
    %v815 = vlaneseq
    %v816 = vshrl.u32 %v815, 7
    %v817 = vsub.s32 %v814, %v816
    %v818 = vrot.slane %v811, %v817
    %s820 = scalar_lea.vmem [#allocation7], 51
    %821 = vst.msk [vmem:[%s820] ss:$8 sm:$0x3] %vm525, %v818
    %822 = vst.msk [vmem:[%s820] ss:$8 sm:$0x0] %vm525, %v818
    %v823 = vcombine.high %v775, %v775
    %s825 = scalar_lea.vmem [#allocation7], 52
    %826 = vst.msk [vmem:[%s825] ss:$8 sm:$0x3] %vm525, %v823
    %827 = vst.msk [vmem:[%s825] ss:$8 sm:$0x0] %vm525, %v823
    %v828 = vcombine.high %v794, %v794
    %s830 = scalar_lea.vmem [#allocation7], 53
    %831 = vst.msk [vmem:[%s830] ss:$8 sm:$0x3] %vm525, %v828
    %832 = vst.msk [vmem:[%s830] ss:$8 sm:$0x0] %vm525, %v828
    %v833 = vcombine.high %v806, %v806
    %s835 = scalar_lea.vmem [#allocation7], 54
    %836 = vst.msk [vmem:[%s835] ss:$8 sm:$0x3] %vm525, %v833
    %837 = vst.msk [vmem:[%s835] ss:$8 sm:$0x0] %vm525, %v833
    %v838 = vcombine.high %v818, %v818
    %s840 = scalar_lea.vmem [#allocation7], 55
    %841 = vst.msk [vmem:[%s840] ss:$8 sm:$0x3] %vm525, %v838
    %842 = vst.msk [vmem:[%s840] ss:$8 sm:$0x0] %vm525, %v838
    %s843 = scalar_lea.vmem [#allocation2], 64
    %v844 = vld [vmem:[%s843] sm:$0xff]
    %v845 = vld [vmem:[%s843 + $0x8] sm:$0xff]
    %v846 = vld [vmem:[%s843 + $0x10] sm:$0xff]
    %v847 = vld [vmem:[%s843 + $0x18] sm:$0xff]
    %v848 = vld [vmem:[%s843 + $0x20] sm:$0xff]
    %v849 = vld [vmem:[%s843 + $0x28] sm:$0xff]
    %v850 = vld [vmem:[%s843 + $0x30] sm:$0xff]
    %v851 = vld [vmem:[%s843 + $0x38] sm:$0xff]
    %s852 = scalar_lea.vmem %s1, 32
    %v853 = vld [vmem:[%s852] sm:$0xff]
    %v854 = vld [vmem:[%s852 + $0x8] sm:$0xff]
    %v855 = vld [vmem:[%s852 + $0x10] sm:$0xff]
    %v856 = vld [vmem:[%s852 + $0x18] sm:$0xff]
    %v857 = vmul.f32 %v848, %v853
    %v858 = vmul.f32 %v849, %v854
    %v859 = vmul.f32 %v850, %v855
    %v860 = vmul.f32 %v851, %v856
    %861 = vrot.lane.b32.xlu0 %v857, 17
    %v862 = vpop.permute.xlu0 %861
    %863 = vrot.lane.b32.xlu0 %v859, 17
    %v864 = vpop.permute.xlu0 %863
    %865 = vrot.lane.b32.xlu0 %v858, 17
    %v866 = vpop.permute.xlu0 %865
    %867 = vrot.lane.b32.xlu0 %v860, 17
    %v868 = vpop.permute.xlu0 %867
    %v869 = vsel %vm190, %v862, %v866
    %v870 = vsel %vm190, %v864, %v868
    %v871 = vsel %vm190, %v866, %v862
    %v872 = vsel %vm190, %v868, %v864
    %v873 = vsel %vm199, %v871, 0.0
    %v874 = vsel %vm200, %v869, 0.0
    %v875 = vsel %vm199, %v872, 0.0
    %v876 = vsel %vm200, %v870, 0.0
    %v877 = vmul.f32 %v873, %v76
    %v878 = vmul.f32 %v874, %v76
    %v879 = vmul.f32 %v875, %v81
    %v880 = vmul.f32 %v876, %v81
    %v881 = vadd.f32 %v877, 0.0
    %v882 = vadd.f32 %v878, 0.0
    %v883 = vadd.f32 %v879, 0.0
    %v884 = vadd.f32 %v880, 0.0
    %885 = vrot.lane.b32.xlu0 %v857, 16
    %v886 = vpop.permute.xlu0 %885
    %887 = vrot.lane.b32.xlu0 %v859, 16
    %v888 = vpop.permute.xlu0 %887
    %889 = vrot.lane.b32.xlu0 %v858, 16
    %v890 = vpop.permute.xlu0 %889
    %891 = vrot.lane.b32.xlu0 %v860, 16
    %v892 = vpop.permute.xlu0 %891
    %v893 = vsel %vm221, %v886, %v890
    %v894 = vsel %vm221, %v888, %v892
    %v895 = vsel %vm221, %v890, %v886
    %v896 = vsel %vm221, %v892, %v888
    %v897 = vsel %vm228, %v895, 0.0
    %v898 = vsel %vm229, %v893, 0.0
    %v899 = vsel %vm228, %v896, 0.0
    %v900 = vsel %vm229, %v894, 0.0
    %v901 = vmul.f32 %v897, %v85
    %v902 = vmul.f32 %v898, %v85
    %v903 = vmul.f32 %v899, %v89
    %v904 = vmul.f32 %v900, %v89
    %v905 = vadd.f32 %v881, %v901
    %v906 = vadd.f32 %v882, %v902
    %v907 = vadd.f32 %v883, %v903
    %v908 = vadd.f32 %v884, %v904
    %909 = vrot.lane.b32.xlu0 %v857, 15
    %v910 = vpop.permute.xlu0 %909
    %911 = vrot.lane.b32.xlu0 %v859, 15
    %v912 = vpop.permute.xlu0 %911
    %913 = vrot.lane.b32.xlu0 %v858, 15
    %v914 = vpop.permute.xlu0 %913
    %915 = vrot.lane.b32.xlu0 %v860, 15
    %v916 = vpop.permute.xlu0 %915
    %v917 = vsel %vm250, %v910, %v914
    %v918 = vsel %vm250, %v912, %v916
    %v919 = vsel %vm250, %v914, %v910
    %v920 = vsel %vm250, %v916, %v912
    %v921 = vsel %vm259, %v919, 0.0
    %v922 = vsel %vm260, %v917, 0.0
    %v923 = vsel %vm259, %v920, 0.0
    %v924 = vsel %vm260, %v918, 0.0
    %v925 = vmul.f32 %v921, %v93
    %v926 = vmul.f32 %v922, %v93
    %v927 = vmul.f32 %v923, %v97
    %v928 = vmul.f32 %v924, %v97
    %v929 = vadd.f32 %v905, %v925
    %v930 = vadd.f32 %v906, %v926
    %v931 = vadd.f32 %v907, %v927
    %v932 = vadd.f32 %v908, %v928
    %933 = vrot.lane.b32.xlu0 %v857, 1
    %v934 = vpop.permute.xlu0 %933
    %935 = vrot.lane.b32.xlu0 %v859, 1
    %v936 = vpop.permute.xlu0 %935
    %937 = vrot.lane.b32.xlu0 %v858, 1
    %v938 = vpop.permute.xlu0 %937
    %939 = vrot.lane.b32.xlu0 %v860, 1
    %v940 = vpop.permute.xlu0 %939
    %v941 = vsel %vm281, %v934, %v938
    %v942 = vsel %vm281, %v936, %v940
    %v943 = vsel %vm281, %v938, %v934
    %v944 = vsel %vm281, %v940, %v936
    %v945 = vsel %vm288, %v943, 0.0
    %v946 = vsel %vm289, %v941, 0.0
    %v947 = vsel %vm288, %v944, 0.0
    %v948 = vsel %vm289, %v942, 0.0
    %v949 = vmul.f32 %v945, %v101
    %v950 = vmul.f32 %v946, %v101
    %v951 = vmul.f32 %v947, %v105
    %v952 = vmul.f32 %v948, %v105
    %v953 = vadd.f32 %v929, %v949
    %v954 = vadd.f32 %v930, %v950
    %v955 = vadd.f32 %v931, %v951
    %v956 = vadd.f32 %v932, %v952
    %v957 = vmul.f32 %v857, %v109
    %v958 = vmul.f32 %v858, %v109
    %v959 = vmul.f32 %v859, %v113
    %v960 = vmul.f32 %v860, %v113
    %v961 = vadd.f32 %v953, %v957
    %v962 = vadd.f32 %v954, %v958
    %v963 = vadd.f32 %v955, %v959
    %v964 = vadd.f32 %v956, %v960
    %965 = vrot.lane.b32.xlu0 %v857, 127
    %v966 = vpop.permute.xlu0 %965
    %967 = vrot.lane.b32.xlu0 %v859, 127
    %v968 = vpop.permute.xlu0 %967
    %969 = vrot.lane.b32.xlu0 %v858, 127
    %v970 = vpop.permute.xlu0 %969
    %971 = vrot.lane.b32.xlu0 %v860, 127
    %v972 = vpop.permute.xlu0 %971
    %v973 = vsel %vm318, %v966, %v970
    %v974 = vsel %vm318, %v968, %v972
    %v975 = vsel %vm318, %v970, %v966
    %v976 = vsel %vm318, %v972, %v968
    %v977 = vsel %vm325, %v973, 0.0
    %v978 = vsel %vm326, %v975, 0.0
    %v979 = vsel %vm325, %v974, 0.0
    %v980 = vsel %vm326, %v976, 0.0
    %v981 = vmul.f32 %v977, %v117
    %v982 = vmul.f32 %v978, %v117
    %v983 = vmul.f32 %v979, %v121
    %v984 = vmul.f32 %v980, %v121
    %v985 = vadd.f32 %v961, %v981
    %v986 = vadd.f32 %v962, %v982
    %v987 = vadd.f32 %v963, %v983
    %v988 = vadd.f32 %v964, %v984
    %989 = vrot.lane.b32.xlu0 %v857, 113
    %v990 = vpop.permute.xlu0 %989
    %991 = vrot.lane.b32.xlu0 %v859, 113
    %v992 = vpop.permute.xlu0 %991
    %993 = vrot.lane.b32.xlu0 %v858, 113
    %v994 = vpop.permute.xlu0 %993
    %995 = vrot.lane.b32.xlu0 %v860, 113
    %v996 = vpop.permute.xlu0 %995
    %v997 = vsel %vm347, %v990, %v994
    %v998 = vsel %vm347, %v992, %v996
    %v999 = vsel %vm347, %v994, %v990
    %v1000 = vsel %vm347, %v996, %v992
    %v1001 = vsel %vm356, %v997, 0.0
    %v1002 = vsel %vm357, %v999, 0.0
    %v1003 = vsel %vm356, %v998, 0.0
    %v1004 = vsel %vm357, %v1000, 0.0
    %v1005 = vmul.f32 %v1001, %v125
    %v1006 = vmul.f32 %v1002, %v125
    %v1007 = vmul.f32 %v1003, %v129
    %v1008 = vmul.f32 %v1004, %v129
    %v1009 = vadd.f32 %v985, %v1005
    %v1010 = vadd.f32 %v986, %v1006
    %v1011 = vadd.f32 %v987, %v1007
    %v1012 = vadd.f32 %v988, %v1008
    %1013 = vrot.lane.b32.xlu0 %v857, 112
    %v1014 = vpop.permute.xlu0 %1013
    %1015 = vrot.lane.b32.xlu0 %v859, 112
    %v1016 = vpop.permute.xlu0 %1015
    %1017 = vrot.lane.b32.xlu0 %v858, 112
    %v1018 = vpop.permute.xlu0 %1017
    %1019 = vrot.lane.b32.xlu0 %v860, 112
    %v1020 = vpop.permute.xlu0 %1019
    %v1021 = vsel %vm378, %v1014, %v1018
    %v1022 = vsel %vm378, %v1016, %v1020
    %v1023 = vsel %vm378, %v1018, %v1014
    %v1024 = vsel %vm378, %v1020, %v1016
    %v1025 = vsel %vm385, %v1021, 0.0
    %v1026 = vsel %vm386, %v1023, 0.0
    %v1027 = vsel %vm385, %v1022, 0.0
    %v1028 = vsel %vm386, %v1024, 0.0
    %v1029 = vmul.f32 %v1025, %v133
    %v1030 = vmul.f32 %v1026, %v133
    %v1031 = vmul.f32 %v1027, %v137
    %v1032 = vmul.f32 %v1028, %v137
    %v1033 = vadd.f32 %v1009, %v1029
    %v1034 = vadd.f32 %v1010, %v1030
    %v1035 = vadd.f32 %v1011, %v1031
    %v1036 = vadd.f32 %v1012, %v1032
    %1037 = vrot.lane.b32.xlu0 %v857, 111
    %v1038 = vpop.permute.xlu0 %1037
    %1039 = vrot.lane.b32.xlu0 %v859, 111
    %v1040 = vpop.permute.xlu0 %1039
    %1041 = vrot.lane.b32.xlu0 %v858, 111
    %v1042 = vpop.permute.xlu0 %1041
    %1043 = vrot.lane.b32.xlu0 %v860, 111
    %v1044 = vpop.permute.xlu0 %1043
    %v1045 = vsel %vm407, %v1038, %v1042
    %v1046 = vsel %vm407, %v1040, %v1044
    %v1047 = vsel %vm407, %v1042, %v1038
    %v1048 = vsel %vm407, %v1044, %v1040
    %v1049 = vsel %vm416, %v1045, 0.0
    %v1050 = vsel %vm417, %v1047, 0.0
    %v1051 = vsel %vm416, %v1046, 0.0
    %v1052 = vsel %vm417, %v1048, 0.0
    %v1053 = vmul.f32 %v1049, %v141
    %v1054 = vmul.f32 %v1050, %v141
    %v1055 = vmul.f32 %v1051, %v145
    %v1056 = vmul.f32 %v1052, %v145
    %v1057 = vadd.f32 %v1033, %v1053
    %v1058 = vadd.f32 %v1034, %v1054
    %v1059 = vadd.f32 %v1035, %v1055
    %v1060 = vadd.f32 %v1036, %v1056
    %v1061 = vadd.f32 %v1057, %v152
    %v1062 = vadd.f32 %v1058, %v152
    %v1063 = vadd.f32 %v1059, %v157
    %v1064 = vadd.f32 %v1060, %v157
    %v1065 = vmax.f32 %v1061, 0.0
    %v1066 = vmax.f32 %v1062, 0.0
    %v1067 = vmax.f32 %v1063, 0.0
    %v1068 = vmax.f32 %v1064, 0.0
    %v1069 = vadd.f32 %v1065, %v1066
    %1070 = vadd.xlane.f32.xlu0 %v1069
    %v1071 = vpop.xlane.xlu0 %1070
    %v1072 = vadd.f32 %v1067, %v1068
    %1073 = vadd.xlane.f32.xlu0 %v1072
    %v1074 = vpop.xlane.xlu0 %1073
    %v1075 = vmul.f32 %v1071, 0.00390625
    %v1076 = vmul.f32 %v1074, 0.00390625
    %v1077 = vmul.f32 %v1075, %v159
    %v1078 = vmul.f32 %v1076, %v160
    %v1079 = vsel %vm448, %v1077, 0.0
    %v1080 = vsel %vm448, %v1078, 0.0
    %v1081 = vadd.f32 %v1079, %v1080
    %v1082 = vrot.slane %v1081, 4
    %v1083 = vadd.f32 %v1081, %v1082
    %v1084 = vrot.slane %v1083, 2
    %v1085 = vadd.f32 %v1083, %v1084
    %v1086 = vrot.slane %v1085, 1
    %v1087 = vadd.f32 %v1085, %v1086
    %v1088 = vadd.f32 %v1087, %v161
    %v1089 = vmax.f32 %v1088, 0.0
    %v1090 = vlaneseq
    %v1091 = vshrl.u32 %v1090, 7
    %v1092 = vsub.s32 0, %v1091
    %v1093 = vrot.slane %v1089, %v1092
    %v1094 = vmul.f32 %v1093, %v162
    %v1095 = vmul.f32 %v1093, %v163
    %v1096 = vadd.f32 %v164, %v1094
    %v1097 = vadd.f32 %v165, %v1095
    %1100 = vrot.lane.b32.xlu0 %v1094, 127
    %v1101 = vpop.permute.xlu0 %1100
    %1102 = vrot.lane.b32.xlu0 %v1095, 127
    %v1103 = vpop.permute.xlu0 %1102
    %v1106 = vadd.f32 %v1096, %v1101
    %v1107 = vadd.f32 %v1097, %v1103
    %v1108 = vsub.f32 0.0, %v1106
    %v1109 = vsub.f32 0.0, %v1107
    %v1110 = vmul.f32 %v1108, 1.442695
    %v1111 = vpow.pop %v1110
    %v1112 = vmul.f32 %v1109, 1.442695
    %v1113 = vpow.pop %v1112
    %v1114 = vadd.f32 %v1111, 1.0
    %v1115 = vadd.f32 %v1113, 1.0
    %v1116 = vrcp.pop %v1114
    %v1117 = vmul.f32 1.0, %v1116
    %v1118 = vrcp.pop %v1115
    %v1119 = vmul.f32 1.0, %v1118
    %1121 = vset.pattern.permute.xlu0 0
    %1122 = vperm.xlu0 %1121, %v1117
    %v1123 = vpop.permute.xlu0 %1122
    %1126 = vset.pattern.permute.xlu0 0
    %1127 = vperm.xlu0 %1126, %v1119
    %v1128 = vpop.permute.xlu0 %1127
    %v1130 = vmul.f32 %v1065, %v1123
    %v1131 = vmul.f32 %v1066, %v1123
    %v1132 = vmul.f32 %v1067, %v1128
    %v1133 = vmul.f32 %v1068, %v1128
    %v1136 = vcombine.low %v844, %v845
    %v1138 = vunpack.c.l.s4 1966171168
    %v1139 = vunpack.c.0.s8 %v1138
    %v1140 = vlaneseq
    %v1141 = vshrl.u32 %v1140, 7
    %v1142 = vsub.s32 %v1139, %v1141
    %v1143 = vrot.slane %v1136, %v1142
    %v1145 = vunpack.c.l.s4 1966171168
    %v1146 = vunpack.c.0.s8 %v1145
    %v1147 = vlaneseq
    %v1148 = vshrl.u32 %v1147, 7
    %v1149 = vsub.s32 %v1146, %v1148
    %v1150 = vrot.slane %v1143, %v1149
    %s1152 = scalar_lea.vmem [#allocation7], 64
    %1153 = vst.msk [vmem:[%s1152] ss:$8 sm:$0x3] %vm525, %v1150
    %1154 = vst.msk [vmem:[%s1152] ss:$8 sm:$0x0] %vm525, %v1150
    %v1157 = vcombine.low %v1130, %v1131
    %v1159 = vunpack.c.l.s4 1966171168
    %v1160 = vunpack.c.0.s8 %v1159
    %v1161 = vlaneseq
    %v1162 = vshrl.u32 %v1161, 7
    %v1163 = vsub.s32 %v1160, %v1162
    %v1164 = vrot.slane %v1157, %v1163
    %v1166 = vunpack.c.l.s4 1966171168
    %v1167 = vunpack.c.0.s8 %v1166
    %v1168 = vlaneseq
    %v1169 = vshrl.u32 %v1168, 7
    %v1170 = vsub.s32 %v1167, %v1169
    %v1171 = vrot.slane %v1164, %v1170
    %s1173 = scalar_lea.vmem %s1152, 1 [#allocation7]
    %1174 = vst.msk [vmem:[%s1173] ss:$8 sm:$0x3] %vm525, %v1171
    %1175 = vst.msk [vmem:[%s1173] ss:$8 sm:$0x0] %vm525, %v1171
    %v1176 = vcombine.high %v1143, %v1143
    %v1178 = vunpack.c.l.s4 1966171168
    %v1179 = vunpack.c.0.s8 %v1178
    %v1180 = vlaneseq
    %v1181 = vshrl.u32 %v1180, 7
    %v1182 = vsub.s32 %v1179, %v1181
    %v1183 = vrot.slane %v1176, %v1182
    %s1185 = scalar_lea.vmem %s1152, 2 [#allocation7]
    %1186 = vst.msk [vmem:[%s1185] ss:$8 sm:$0x3] %vm525, %v1183
    %1187 = vst.msk [vmem:[%s1185] ss:$8 sm:$0x0] %vm525, %v1183
    %v1188 = vcombine.high %v1164, %v1164
    %v1190 = vunpack.c.l.s4 1966171168
    %v1191 = vunpack.c.0.s8 %v1190
    %v1192 = vlaneseq
    %v1193 = vshrl.u32 %v1192, 7
    %v1194 = vsub.s32 %v1191, %v1193
    %v1195 = vrot.slane %v1188, %v1194
    %s1197 = scalar_lea.vmem %s1152, 3 [#allocation7]
    %1198 = vst.msk [vmem:[%s1197] ss:$8 sm:$0x3] %vm525, %v1195
    %1199 = vst.msk [vmem:[%s1197] ss:$8 sm:$0x0] %vm525, %v1195
    %v1200 = vcombine.high %v1150, %v1150
    %s1202 = scalar_lea.vmem %s1152, 4 [#allocation7]
    %1203 = vst.msk [vmem:[%s1202] ss:$8 sm:$0x3] %vm525, %v1200
    %1204 = vst.msk [vmem:[%s1202] ss:$8 sm:$0x0] %vm525, %v1200
    %v1205 = vcombine.high %v1171, %v1171
    %s1207 = scalar_lea.vmem %s1152, 5 [#allocation7]
    %1208 = vst.msk [vmem:[%s1207] ss:$8 sm:$0x3] %vm525, %v1205
    %1209 = vst.msk [vmem:[%s1207] ss:$8 sm:$0x0] %vm525, %v1205
    %v1210 = vcombine.high %v1183, %v1183
    %s1212 = scalar_lea.vmem %s1152, 6 [#allocation7]
    %1213 = vst.msk [vmem:[%s1212] ss:$8 sm:$0x3] %vm525, %v1210
    %1214 = vst.msk [vmem:[%s1212] ss:$8 sm:$0x0] %vm525, %v1210
    %v1215 = vcombine.high %v1195, %v1195
    %s1217 = scalar_lea.vmem %s1152, 7 [#allocation7]
    %1218 = vst.msk [vmem:[%s1217] ss:$8 sm:$0x3] %vm525, %v1215
    %1219 = vst.msk [vmem:[%s1217] ss:$8 sm:$0x0] %vm525, %v1215
    %v1220 = vcombine.high %v844, %v845
    %v1222 = vunpack.c.l.s4 1966171168
    %v1223 = vunpack.c.0.s8 %v1222
    %v1224 = vlaneseq
    %v1225 = vshrl.u32 %v1224, 7
    %v1226 = vsub.s32 %v1223, %v1225
    %v1227 = vrot.slane %v1220, %v1226
    %v1229 = vunpack.c.l.s4 1966171168
    %v1230 = vunpack.c.0.s8 %v1229
    %v1231 = vlaneseq
    %v1232 = vshrl.u32 %v1231, 7
    %v1233 = vsub.s32 %v1230, %v1232
    %v1234 = vrot.slane %v1227, %v1233
    %s1236 = scalar_lea.vmem %s1152, 16 [#allocation7]
    %1237 = vst.msk [vmem:[%s1236] ss:$8 sm:$0x3] %vm525, %v1234
    %1238 = vst.msk [vmem:[%s1236] ss:$8 sm:$0x0] %vm525, %v1234
    %v1239 = vcombine.high %v1130, %v1131
    %v1241 = vunpack.c.l.s4 1966171168
    %v1242 = vunpack.c.0.s8 %v1241
    %v1243 = vlaneseq
    %v1244 = vshrl.u32 %v1243, 7
    %v1245 = vsub.s32 %v1242, %v1244
    %v1246 = vrot.slane %v1239, %v1245
    %v1248 = vunpack.c.l.s4 1966171168
    %v1249 = vunpack.c.0.s8 %v1248
    %v1250 = vlaneseq
    %v1251 = vshrl.u32 %v1250, 7
    %v1252 = vsub.s32 %v1249, %v1251
    %v1253 = vrot.slane %v1246, %v1252
    %s1255 = scalar_lea.vmem %s1152, 17 [#allocation7]
    %1256 = vst.msk [vmem:[%s1255] ss:$8 sm:$0x3] %vm525, %v1253
    %1257 = vst.msk [vmem:[%s1255] ss:$8 sm:$0x0] %vm525, %v1253
    %v1258 = vcombine.high %v1227, %v1227
    %v1260 = vunpack.c.l.s4 1966171168
    %v1261 = vunpack.c.0.s8 %v1260
    %v1262 = vlaneseq
    %v1263 = vshrl.u32 %v1262, 7
    %v1264 = vsub.s32 %v1261, %v1263
    %v1265 = vrot.slane %v1258, %v1264
    %s1267 = scalar_lea.vmem %s1152, 18 [#allocation7]
    %1268 = vst.msk [vmem:[%s1267] ss:$8 sm:$0x3] %vm525, %v1265
    %1269 = vst.msk [vmem:[%s1267] ss:$8 sm:$0x0] %vm525, %v1265
    %v1270 = vcombine.high %v1246, %v1246
    %v1272 = vunpack.c.l.s4 1966171168
    %v1273 = vunpack.c.0.s8 %v1272
    %v1274 = vlaneseq
    %v1275 = vshrl.u32 %v1274, 7
    %v1276 = vsub.s32 %v1273, %v1275
    %v1277 = vrot.slane %v1270, %v1276
    %s1279 = scalar_lea.vmem %s1152, 19 [#allocation7]
    %1280 = vst.msk [vmem:[%s1279] ss:$8 sm:$0x3] %vm525, %v1277
    %1281 = vst.msk [vmem:[%s1279] ss:$8 sm:$0x0] %vm525, %v1277
    %v1282 = vcombine.high %v1234, %v1234
    %s1284 = scalar_lea.vmem %s1152, 20 [#allocation7]
    %1285 = vst.msk [vmem:[%s1284] ss:$8 sm:$0x3] %vm525, %v1282
    %1286 = vst.msk [vmem:[%s1284] ss:$8 sm:$0x0] %vm525, %v1282
    %v1287 = vcombine.high %v1253, %v1253
    %s1289 = scalar_lea.vmem %s1152, 21 [#allocation7]
    %1290 = vst.msk [vmem:[%s1289] ss:$8 sm:$0x3] %vm525, %v1287
    %1291 = vst.msk [vmem:[%s1289] ss:$8 sm:$0x0] %vm525, %v1287
    %v1292 = vcombine.high %v1265, %v1265
    %s1294 = scalar_lea.vmem %s1152, 22 [#allocation7]
    %1295 = vst.msk [vmem:[%s1294] ss:$8 sm:$0x3] %vm525, %v1292
    %1296 = vst.msk [vmem:[%s1294] ss:$8 sm:$0x0] %vm525, %v1292
    %v1297 = vcombine.high %v1277, %v1277
    %s1299 = scalar_lea.vmem %s1152, 23 [#allocation7]
    %1300 = vst.msk [vmem:[%s1299] ss:$8 sm:$0x3] %vm525, %v1297
    %1301 = vst.msk [vmem:[%s1299] ss:$8 sm:$0x0] %vm525, %v1297
    %v1304 = vcombine.low %v846, %v847
    %v1306 = vunpack.c.l.s4 1966171168
    %v1307 = vunpack.c.0.s8 %v1306
    %v1308 = vlaneseq
    %v1309 = vshrl.u32 %v1308, 7
    %v1310 = vsub.s32 %v1307, %v1309
    %v1311 = vrot.slane %v1304, %v1310
    %v1313 = vunpack.c.l.s4 1966171168
    %v1314 = vunpack.c.0.s8 %v1313
    %v1315 = vlaneseq
    %v1316 = vshrl.u32 %v1315, 7
    %v1317 = vsub.s32 %v1314, %v1316
    %v1318 = vrot.slane %v1311, %v1317
    %s1320 = scalar_lea.vmem %s1152, 32 [#allocation7]
    %1321 = vst.msk [vmem:[%s1320] ss:$8 sm:$0x3] %vm525, %v1318
    %1322 = vst.msk [vmem:[%s1320] ss:$8 sm:$0x0] %vm525, %v1318
    %v1325 = vcombine.low %v1132, %v1133
    %v1327 = vunpack.c.l.s4 1966171168
    %v1328 = vunpack.c.0.s8 %v1327
    %v1329 = vlaneseq
    %v1330 = vshrl.u32 %v1329, 7
    %v1331 = vsub.s32 %v1328, %v1330
    %v1332 = vrot.slane %v1325, %v1331
    %v1334 = vunpack.c.l.s4 1966171168
    %v1335 = vunpack.c.0.s8 %v1334
    %v1336 = vlaneseq
    %v1337 = vshrl.u32 %v1336, 7
    %v1338 = vsub.s32 %v1335, %v1337
    %v1339 = vrot.slane %v1332, %v1338
    %s1341 = scalar_lea.vmem %s1152, 33 [#allocation7]
    %1342 = vst.msk [vmem:[%s1341] ss:$8 sm:$0x3] %vm525, %v1339
    %1343 = vst.msk [vmem:[%s1341] ss:$8 sm:$0x0] %vm525, %v1339
    %v1344 = vcombine.high %v1311, %v1311
    %v1346 = vunpack.c.l.s4 1966171168
    %v1347 = vunpack.c.0.s8 %v1346
    %v1348 = vlaneseq
    %v1349 = vshrl.u32 %v1348, 7
    %v1350 = vsub.s32 %v1347, %v1349
    %v1351 = vrot.slane %v1344, %v1350
    %s1353 = scalar_lea.vmem %s1152, 34 [#allocation7]
    %1354 = vst.msk [vmem:[%s1353] ss:$8 sm:$0x3] %vm525, %v1351
    %1355 = vst.msk [vmem:[%s1353] ss:$8 sm:$0x0] %vm525, %v1351
    %v1356 = vcombine.high %v1332, %v1332
    %v1358 = vunpack.c.l.s4 1966171168
    %v1359 = vunpack.c.0.s8 %v1358
    %v1360 = vlaneseq
    %v1361 = vshrl.u32 %v1360, 7
    %v1362 = vsub.s32 %v1359, %v1361
    %v1363 = vrot.slane %v1356, %v1362
    %s1365 = scalar_lea.vmem %s1152, 35 [#allocation7]
    %1366 = vst.msk [vmem:[%s1365] ss:$8 sm:$0x3] %vm525, %v1363
    %1367 = vst.msk [vmem:[%s1365] ss:$8 sm:$0x0] %vm525, %v1363
    %v1368 = vcombine.high %v1318, %v1318
    %s1370 = scalar_lea.vmem %s1152, 36 [#allocation7]
    %1371 = vst.msk [vmem:[%s1370] ss:$8 sm:$0x3] %vm525, %v1368
    %1372 = vst.msk [vmem:[%s1370] ss:$8 sm:$0x0] %vm525, %v1368
    %v1373 = vcombine.high %v1339, %v1339
    %s1375 = scalar_lea.vmem %s1152, 37 [#allocation7]
    %1376 = vst.msk [vmem:[%s1375] ss:$8 sm:$0x3] %vm525, %v1373
    %1377 = vst.msk [vmem:[%s1375] ss:$8 sm:$0x0] %vm525, %v1373
    %v1378 = vcombine.high %v1351, %v1351
    %s1380 = scalar_lea.vmem %s1152, 38 [#allocation7]
    %1381 = vst.msk [vmem:[%s1380] ss:$8 sm:$0x3] %vm525, %v1378
    %1382 = vst.msk [vmem:[%s1380] ss:$8 sm:$0x0] %vm525, %v1378
    %v1383 = vcombine.high %v1363, %v1363
    %s1385 = scalar_lea.vmem %s1152, 39 [#allocation7]
    %1386 = vst.msk [vmem:[%s1385] ss:$8 sm:$0x3] %vm525, %v1383
    %1387 = vst.msk [vmem:[%s1385] ss:$8 sm:$0x0] %vm525, %v1383
    %v1388 = vcombine.high %v846, %v847
    %v1390 = vunpack.c.l.s4 1966171168
    %v1391 = vunpack.c.0.s8 %v1390
    %v1392 = vlaneseq
    %v1393 = vshrl.u32 %v1392, 7
    %v1394 = vsub.s32 %v1391, %v1393
    %v1395 = vrot.slane %v1388, %v1394
    %v1397 = vunpack.c.l.s4 1966171168
    %v1398 = vunpack.c.0.s8 %v1397
    %v1399 = vlaneseq
    %v1400 = vshrl.u32 %v1399, 7
    %v1401 = vsub.s32 %v1398, %v1400
    %v1402 = vrot.slane %v1395, %v1401
    %s1404 = scalar_lea.vmem %s1152, 48 [#allocation7]
    %1405 = vst.msk [vmem:[%s1404] ss:$8 sm:$0x3] %vm525, %v1402
    %1406 = vst.msk [vmem:[%s1404] ss:$8 sm:$0x0] %vm525, %v1402
    %v1407 = vcombine.high %v1132, %v1133
    %v1409 = vunpack.c.l.s4 1966171168
    %v1410 = vunpack.c.0.s8 %v1409
    %v1411 = vlaneseq
    %v1412 = vshrl.u32 %v1411, 7
    %v1413 = vsub.s32 %v1410, %v1412
    %v1414 = vrot.slane %v1407, %v1413
    %v1416 = vunpack.c.l.s4 1966171168
    %v1417 = vunpack.c.0.s8 %v1416
    %v1418 = vlaneseq
    %v1419 = vshrl.u32 %v1418, 7
    %v1420 = vsub.s32 %v1417, %v1419
    %v1421 = vrot.slane %v1414, %v1420
    %s1423 = scalar_lea.vmem %s1152, 49 [#allocation7]
    %1424 = vst.msk [vmem:[%s1423] ss:$8 sm:$0x3] %vm525, %v1421
    %1425 = vst.msk [vmem:[%s1423] ss:$8 sm:$0x0] %vm525, %v1421
    %v1426 = vcombine.high %v1395, %v1395
    %v1428 = vunpack.c.l.s4 1966171168
    %v1429 = vunpack.c.0.s8 %v1428
    %v1430 = vlaneseq
    %v1431 = vshrl.u32 %v1430, 7
    %v1432 = vsub.s32 %v1429, %v1431
    %v1433 = vrot.slane %v1426, %v1432
    %s1435 = scalar_lea.vmem %s1152, 50 [#allocation7]
    %1436 = vst.msk [vmem:[%s1435] ss:$8 sm:$0x3] %vm525, %v1433
    %1437 = vst.msk [vmem:[%s1435] ss:$8 sm:$0x0] %vm525, %v1433
    %v1438 = vcombine.high %v1414, %v1414
    %v1440 = vunpack.c.l.s4 1966171168
    %v1441 = vunpack.c.0.s8 %v1440
    %v1442 = vlaneseq
    %v1443 = vshrl.u32 %v1442, 7
    %v1444 = vsub.s32 %v1441, %v1443
    %v1445 = vrot.slane %v1438, %v1444
    %s1447 = scalar_lea.vmem %s1152, 51 [#allocation7]
    %1448 = vst.msk [vmem:[%s1447] ss:$8 sm:$0x3] %vm525, %v1445
    %1449 = vst.msk [vmem:[%s1447] ss:$8 sm:$0x0] %vm525, %v1445
    %v1450 = vcombine.high %v1402, %v1402
    %s1452 = scalar_lea.vmem %s1152, 52 [#allocation7]
    %1453 = vst.msk [vmem:[%s1452] ss:$8 sm:$0x3] %vm525, %v1450
    %1454 = vst.msk [vmem:[%s1452] ss:$8 sm:$0x0] %vm525, %v1450
    %v1455 = vcombine.high %v1421, %v1421
    %s1457 = scalar_lea.vmem %s1152, 53 [#allocation7]
    %1458 = vst.msk [vmem:[%s1457] ss:$8 sm:$0x3] %vm525, %v1455
    %1459 = vst.msk [vmem:[%s1457] ss:$8 sm:$0x0] %vm525, %v1455
    %v1460 = vcombine.high %v1433, %v1433
    %s1462 = scalar_lea.vmem %s1152, 54 [#allocation7]
    %1463 = vst.msk [vmem:[%s1462] ss:$8 sm:$0x3] %vm525, %v1460
    %1464 = vst.msk [vmem:[%s1462] ss:$8 sm:$0x0] %vm525, %v1460
    %v1465 = vcombine.high %v1445, %v1445
    %s1467 = scalar_lea.vmem %s1152, 55 [#allocation7]
    %1468 = vst.msk [vmem:[%s1467] ss:$8 sm:$0x3] %vm525, %v1465
    %1469 = vst.msk [vmem:[%s1467] ss:$8 sm:$0x0] %vm525, %v1465
    // Predicated region
    $region42: #{tpu_custom_call.1} parent=1 // pred_check
      _
    $region43: #{tpu_custom_call.1} parent=1 // pred_check_branch
      %1471 = sbr.rel (0) target = $region45
    $region44: #{tpu_custom_call.1} parent=1 // pred_region
      %s1473 = ssub.s32 2048, 2048
      %1474 = vsyncadd [#allocation4], %s1473
      %s1475 = sshll.u32 [#allocation7], 4
      %s1476 = int_to_ptr.vmem [resolvable:$true] %s1475
      %1481 = dma.vmem_to_hbm [thread:$0]  %s1476, 2048, %s8, [#allocation4], 256, 256, 16
    $region45: #{tpu_custom_call.1} parent=1 // pred_fallthru
      _
    // Predicated region
    $region46: #{tpu_custom_call.1} parent=1 // pred_check
      _
    $region47: #{tpu_custom_call.1} parent=1 // pred_check_branch
      %1483 = sbr.rel (0) target = $region49
    $region48: #{tpu_custom_call.1} parent=1 // pred_region
      %1484 = dma.done [#allocation4], 2048
    $region49: #{tpu_custom_call.1} parent=1 // pred_fallthru
      _
    %1485 = vsyncpa [#allocation3], 1
    %1486 = vsyncpa [#allocation6], 1
    %1487 = vsyncpa [#allocation4], 1

</llo_original>
